<compile_context>
chip_gen: v7x
topology: tpu7x:2x2x1
jax: 0.10.0
libtpu: 0.0.40
codegen_flags: <defaults>
</compile_context>

<pallas_src>
import functools

import jax
import jax.numpy as jnp
from jax.experimental import pallas as pl
from jax.experimental.pallas import tpu as pltpu

LN_EPS = 1e-5          # nn.LayerNorm default
LRELU_SLOPE = 0.01     # nn.LeakyReLU default negative_slope
LANE = 128


def _round_up(n, m):
    return (n + m - 1) // m * m


def _cdiv(a, b):
    return (a + b - 1) // b


# ---------------------------------------------------------------------------
# Fused kernel: the whole MLP for one batch tile.  Activations never leave VMEM.
# ---------------------------------------------------------------------------
def _mlp_kernel(*refs, hidden_valid):
    """refs = (x_ref, w_0..w_{L-1}, p_0..p_{L-1}, o_ref).

    x_ref:  [TB, in_pad] bf16.
    w_l:    [d_l_pad, d_{l+1}_pad] bf16  (per-layer rectangular padding).
    p_l:    [3, d_{l+1}_pad] f32, rows = (bias, gamma, beta).
    o_ref:  [TB, out_pad] f32.
    hidden_valid: static tuple of valid feature counts for the 5 LayerNorm'd layers.
    """
    n_layers = len(hidden_valid) + 1
    x_ref = refs[0]
    w_refs = refs[1:1 + n_layers]
    p_refs = refs[1 + n_layers:1 + 2 * n_layers]
    o_ref = refs[1 + 2 * n_layers]

    h = x_ref[...]                                        # bf16 activations
    # 5 hidden layers: Linear -> LayerNorm -> LeakyReLU (-> Dropout: identity).
    for l, nvalid in enumerate(hidden_valid):
        bias = p_refs[l][0:1, :]
        gamma = p_refs[l][1:2, :]
        beta = p_refs[l][2:3, :]
        y = jnp.dot(h, w_refs[l][...], preferred_element_type=jnp.float32) + bias
        # One-pass LayerNorm statistics over the `nvalid` real features.  Padded
        # lanes of y are exactly 0 (zero-padded W columns / zero bias), so plain
        # sums over the padded width equal the sums over the valid features.
        inv_n = 1.0 / float(nvalid)
        mean = jnp.sum(y, axis=-1, keepdims=True) * inv_n
        ex2 = jnp.sum(y * y, axis=-1, keepdims=True) * inv_n
        var = jnp.maximum(ex2 - mean * mean, 0.0)         # guard f32 cancellation
        yn = (y - mean) * jax.lax.rsqrt(var + LN_EPS)
        yn = yn * gamma + beta                            # padded gamma/beta are 0
        act = jnp.where(yn >= 0, yn, LRELU_SLOPE * yn)    # LeakyReLU (f32)
        # Dropout(p=0.1): identity in inference mode.
        h = act.astype(jnp.bfloat16)                      # bf16 into next MXU matmul

    # Final Linear (no LayerNorm / activation), lane-dense f32 output.
    y = jnp.dot(h, w_refs[-1][...], preferred_element_type=jnp.float32)
    o_ref[...] = y + p_refs[-1][0:1, :]


# ---------------------------------------------------------------------------
# Parameter construction (mirrors PyTorch nn.Linear / nn.LayerNorm defaults),
# per-layer rectangular padding to lane-aligned widths.
# ---------------------------------------------------------------------------
def init_mlp_params(key, input_size, output_size):
    hidden = input_size + output_size
    dims = (input_size, 3 * hidden, 2 * hidden, hidden, 2 * hidden, 3 * hidden,
            output_size)
    dims_pad = tuple(_round_up(d, LANE) for d in dims)
    n_layers = len(dims) - 1

    weights, params = [], []
    for l in range(n_layers):
        fan_in, fan_out = dims[l], dims[l + 1]
        key, kw, kb = jax.random.split(key, 3)
        bound = 1.0 / (fan_in ** 0.5)
        w = jax.random.uniform(kw, (fan_in, fan_out), jnp.float32, -bound, bound)
        b = jax.random.uniform(kb, (fan_out,), jnp.float32, -bound, bound)
        w_pad = jnp.zeros((dims_pad[l], dims_pad[l + 1]), jnp.float32)
        w_pad = w_pad.at[:fan_in, :fan_out].set(w)
        p_pad = jnp.zeros((3, dims_pad[l + 1]), jnp.float32)   # bias, gamma, beta
        p_pad = p_pad.at[0, :fan_out].set(b)
        if l < n_layers - 1:                                   # LayerNorm gamma = 1
            p_pad = p_pad.at[1, :fan_out].set(1.0)
        weights.append(w_pad.astype(jnp.bfloat16))
        params.append(p_pad)
    return tuple(weights), tuple(params), dims


# ---------------------------------------------------------------------------
# VMEM budget: ~85% of this chip's physical per-TensorCore VMEM.
# ---------------------------------------------------------------------------
def _vmem_limit_bytes():
    cap = None
    try:
        info = pltpu.get_tpu_info()
        for attr in ("vmem_capacity_bytes", "vmem_size_bytes", "vmem_bytes"):
            v = getattr(info, attr, None)
            if v:
                cap = int(v)
                break
    except Exception:
        cap = None
    if cap is None:
        kind = ""
        try:
            kind = jax.devices()[0].device_kind.lower()
        except Exception:
            pass
        cap = 64 * 1024 * 1024 if "7" in kind else 128 * 1024 * 1024
    return int(cap * 0.85)       # ~108 MiB on v5e/v6e, ~54 MiB on v7x


# ---------------------------------------------------------------------------
# Wrapper: pad batch / input features, single fused pallas_call, slice result.
# ---------------------------------------------------------------------------
@functools.partial(jax.jit, static_argnames=("dims", "tb", "vmem_limit"))
def _mlp_forward_impl(x, weights, params, *, dims, tb, vmem_limit):
    batch = x.shape[0]
    in_pad = weights[0].shape[0]
    out_pad = weights[-1].shape[1]
    b_pad = _round_up(batch, tb)

    x_pad = jnp.zeros((b_pad, in_pad), jnp.bfloat16)
    x_pad = x_pad.at[:batch, :dims[0]].set(x.astype(jnp.bfloat16))

    kernel = functools.partial(_mlp_kernel, hidden_valid=tuple(dims[1:-1]))

    def _const(i):                       # grid-invariant (resident) blocks
        return (0, 0)

    out = pl.pallas_call(
        kernel,
        out_shape=jax.ShapeDtypeStruct((b_pad, out_pad), jnp.float32),
        grid=(b_pad // tb,),
        in_specs=(
            [pl.BlockSpec((tb, in_pad), lambda i: (i, 0))]            # activations
            + [pl.BlockSpec(w.shape, _const) for w in weights]        # weights (resident)
            + [pl.BlockSpec(p.shape, _const) for p in params]         # bias/gamma/beta
        ),
        out_specs=pl.BlockSpec((tb, out_pad), lambda i: (i, 0)),
        compiler_params=pltpu.CompilerParams(
            dimension_semantics=("parallel",),     # megacore batch sharding on v7x
            vmem_limit_bytes=vmem_limit,
        ),
    )(x_pad, *weights, *params)
    return out[:batch, :dims[-1]]


def mlp_forward(x, weights, params, dims, *, max_tb=256):
    batch = x.shape[0]
    # Minimise tail padding; give v7x's two TensorCores >= 2 grid steps for
    # medium/large batches; keep tb 16-sublane aligned (bf16 activation tiles).
    num_tiles = max(_cdiv(batch, max_tb), 2 if batch >= 64 else 1)
    tb = _round_up(_cdiv(batch, num_tiles), 16)
    return _mlp_forward_impl(x, tuple(weights), tuple(params),
                             dims=tuple(dims), tb=tb,
                             vmem_limit=_vmem_limit_bytes())


# ---------------------------------------------------------------------------
# Pure-JAX reference (f32) for a sanity check.
# ---------------------------------------------------------------------------
def mlp_reference(x, weights, params, dims):
    h = x.astype(jnp.float32)
    n_layers = len(dims) - 1
    for l in range(n_layers - 1):
        w = weights[l][:dims[l], :dims[l + 1]].astype(jnp.float32)
        b = params[l][0, :dims[l + 1]]
        g = params[l][1, :dims[l + 1]]
        bt = params[l][2, :dims[l + 1]]
        y = h @ w + b
        mean = jnp.mean(y, axis=-1, keepdims=True)
        var = jnp.mean((y - mean) ** 2, axis=-1, keepdims=True)
        y = (y - mean) * jax.lax.rsqrt(var + LN_EPS) * g + bt
        h = jnp.where(y >= 0, y, LRELU_SLOPE * y)
    w = weights[-1][:dims[-2], :dims[-1]].astype(jnp.float32)
    b = params[-1][0, :dims[-1]]
    return h @ w + b


# ---------------------------------------------------------------------------
if __name__ == "__main__":
    input_size = 16
    output_size = 8
    batch = 8

    key = jax.random.PRNGKey(0)
    key, kx = jax.random.split(key)
    x = jax.random.normal(kx, (batch, input_size), jnp.float32)

    weights, params, dims = init_mlp_params(key, input_size, output_size)

    out = mlp_forward(x, weights, params, dims)
    out = jax.block_until_ready(out)

    assert out.shape == (batch, output_size), out.shape
    assert bool(jnp.all(jnp.isfinite(out)))

    ref = mlp_reference(x, weights, params, dims)
    max_err = float(jnp.max(jnp.abs(out - ref)))
    assert max_err < 0.25, f"max abs error vs f32 reference too large: {max_err}"

    print("KERNEL_OK")
</pallas_src>

<mosaic_0001>
module attributes {stable_mosaic.version = 11 : i64} {
  func.func @_mlp_kernel(%arg0: i32, %arg1: memref<16x128xbf16, #tpu.memory_space<vmem>>, %arg2: memref<128x128xbf16, #tpu.memory_space<vmem>>, %arg3: memref<128x128xbf16, #tpu.memory_space<vmem>>, %arg4: memref<128x128xbf16, #tpu.memory_space<vmem>>, %arg5: memref<128x128xbf16, #tpu.memory_space<vmem>>, %arg6: memref<128x128xbf16, #tpu.memory_space<vmem>>, %arg7: memref<128x128xbf16, #tpu.memory_space<vmem>>, %arg8: memref<3x128xf32, #tpu.memory_space<vmem>>, %arg9: memref<3x128xf32, #tpu.memory_space<vmem>>, %arg10: memref<3x128xf32, #tpu.memory_space<vmem>>, %arg11: memref<3x128xf32, #tpu.memory_space<vmem>>, %arg12: memref<3x128xf32, #tpu.memory_space<vmem>>, %arg13: memref<3x128xf32, #tpu.memory_space<vmem>>, %arg14: memref<16x128xf32, #tpu.memory_space<vmem>>) attributes {dimension_semantics = [#tpu.dimension_semantics<parallel>], iteration_bounds = array<i64: 1>, scalar_prefetch = 0 : i64, scratch_operands = 0 : i64, tpu.core_type = #tpu.core_type<tc>, window_params = [{transform_indices = @transform_0, window_bounds = array<i64: 16, 128>}, {pipeline_mode = #tpu.pipeline_mode<synchronous>, transform_indices = @transform_1, window_bounds = array<i64: 128, 128>}, {pipeline_mode = #tpu.pipeline_mode<synchronous>, transform_indices = @transform_2, window_bounds = array<i64: 128, 128>}, {pipeline_mode = #tpu.pipeline_mode<synchronous>, transform_indices = @transform_3, window_bounds = array<i64: 128, 128>}, {pipeline_mode = #tpu.pipeline_mode<synchronous>, transform_indices = @transform_4, window_bounds = array<i64: 128, 128>}, {pipeline_mode = #tpu.pipeline_mode<synchronous>, transform_indices = @transform_5, window_bounds = array<i64: 128, 128>}, {pipeline_mode = #tpu.pipeline_mode<synchronous>, transform_indices = @transform_6, window_bounds = array<i64: 128, 128>}, {pipeline_mode = #tpu.pipeline_mode<synchronous>, transform_indices = @transform_7, window_bounds = array<i64: 3, 128>}, {pipeline_mode = #tpu.pipeline_mode<synchronous>, transform_indices = @transform_8, window_bounds = array<i64: 3, 128>}, {pipeline_mode = #tpu.pipeline_mode<synchronous>, transform_indices = @transform_9, window_bounds = array<i64: 3, 128>}, {pipeline_mode = #tpu.pipeline_mode<synchronous>, transform_indices = @transform_10, window_bounds = array<i64: 3, 128>}, {pipeline_mode = #tpu.pipeline_mode<synchronous>, transform_indices = @transform_11, window_bounds = array<i64: 3, 128>}, {pipeline_mode = #tpu.pipeline_mode<synchronous>, transform_indices = @transform_12, window_bounds = array<i64: 3, 128>}, {transform_indices = @transform_13, window_bounds = array<i64: 16, 128>}]} {
    %c0 = arith.constant 0 : index
    %c0_0 = arith.constant 0 : index
    %0 = vector.load %arg1[%c0, %c0_0] : memref<16x128xbf16, #tpu.memory_space<vmem>>, vector<16x128xbf16>
    %c0_1 = arith.constant 0 : index
    %c0_2 = arith.constant 0 : index
    %1 = vector.load %arg8[%c0_1, %c0_2] : memref<3x128xf32, #tpu.memory_space<vmem>>, vector<1x128xf32>
    %c1 = arith.constant 1 : index
    %c0_3 = arith.constant 0 : index
    %2 = vector.load %arg8[%c1, %c0_3] : memref<3x128xf32, #tpu.memory_space<vmem>>, vector<1x128xf32>
    %c2 = arith.constant 2 : index
    %c0_4 = arith.constant 0 : index
    %3 = vector.load %arg8[%c2, %c0_4] : memref<3x128xf32, #tpu.memory_space<vmem>>, vector<1x128xf32>
    %c0_5 = arith.constant 0 : index
    %c0_6 = arith.constant 0 : index
    %4 = vector.load %arg2[%c0_5, %c0_6] : memref<128x128xbf16, #tpu.memory_space<vmem>>, vector<128x128xbf16>
    %cst = arith.constant dense<0.000000e+00> : vector<16x128xf32>
    %5 = tpu.matmul %0, %4, %cst {dimension_numbers = #tpu.dot_dimension_numbers<[1], [0], [0], [1], [0, 0, 1, 1], [], []>} : vector<16x128xbf16>, vector<128x128xbf16>, vector<16x128xf32> -> vector<16x128xf32>
    %6 = vector.broadcast %1 : vector<1x128xf32> to vector<16x128xf32>
    %7 = arith.addf %5, %6 : vector<16x128xf32>
    %cst_7 = arith.constant dense<0.000000e+00> : vector<16xf32>
    %8 = vector.multi_reduction <add>, %7, %cst_7 [1] : vector<16x128xf32> to vector<16xf32>
    %9 = vector.shape_cast %8 : vector<16xf32> to vector<16x1xf32>
    %cst_8 = arith.constant 0.013888889 : f32
    %10 = vector.broadcast %cst_8 : f32 to vector<16x1xf32>
    %11 = arith.mulf %9, %10 : vector<16x1xf32>
    %12 = arith.mulf %7, %7 : vector<16x128xf32>
    %cst_9 = arith.constant dense<0.000000e+00> : vector<16xf32>
    %13 = vector.multi_reduction <add>, %12, %cst_9 [1] : vector<16x128xf32> to vector<16xf32>
    %14 = vector.shape_cast %13 : vector<16xf32> to vector<16x1xf32>
    %cst_10 = arith.constant 0.013888889 : f32
    %15 = vector.broadcast %cst_10 : f32 to vector<16x1xf32>
    %16 = arith.mulf %14, %15 : vector<16x1xf32>
    %17 = arith.mulf %11, %11 : vector<16x1xf32>
    %18 = arith.subf %16, %17 : vector<16x1xf32>
    %cst_11 = arith.constant 0.000000e+00 : f32
    %19 = vector.broadcast %cst_11 : f32 to vector<16x1xf32>
    %20 = arith.maximumf %18, %19 : vector<16x1xf32>
    %21 = vector.broadcast %11 : vector<16x1xf32> to vector<16x128xf32>
    %22 = arith.subf %7, %21 : vector<16x128xf32>
    %cst_12 = arith.constant 9.99999974E-6 : f32
    %23 = vector.broadcast %cst_12 : f32 to vector<16x1xf32>
    %24 = arith.addf %20, %23 : vector<16x1xf32>
    %25 = math.rsqrt %24 : vector<16x1xf32>
    %26 = vector.broadcast %25 : vector<16x1xf32> to vector<16x128xf32>
    %27 = arith.mulf %22, %26 : vector<16x128xf32>
    %28 = vector.broadcast %2 : vector<1x128xf32> to vector<16x128xf32>
    %29 = arith.mulf %27, %28 : vector<16x128xf32>
    %30 = vector.broadcast %3 : vector<1x128xf32> to vector<16x128xf32>
    %31 = arith.addf %29, %30 : vector<16x128xf32>
    %cst_13 = arith.constant 0.000000e+00 : f32
    %32 = vector.broadcast %cst_13 : f32 to vector<16x128xf32>
    %33 = arith.cmpf oge, %31, %32 : vector<16x128xf32>
    %cst_14 = arith.constant 0.00999999977 : f32
    %34 = vector.broadcast %cst_14 : f32 to vector<16x128xf32>
    %35 = arith.mulf %34, %31 : vector<16x128xf32>
    %36 = arith.select %33, %31, %35 : vector<16x128xi1>, vector<16x128xf32>
    %37 = arith.truncf %36 : vector<16x128xf32> to vector<16x128xbf16>
    %c0_15 = arith.constant 0 : index
    %c0_16 = arith.constant 0 : index
    %38 = vector.load %arg9[%c0_15, %c0_16] : memref<3x128xf32, #tpu.memory_space<vmem>>, vector<1x128xf32>
    %c1_17 = arith.constant 1 : index
    %c0_18 = arith.constant 0 : index
    %39 = vector.load %arg9[%c1_17, %c0_18] : memref<3x128xf32, #tpu.memory_space<vmem>>, vector<1x128xf32>
    %c2_19 = arith.constant 2 : index
    %c0_20 = arith.constant 0 : index
    %40 = vector.load %arg9[%c2_19, %c0_20] : memref<3x128xf32, #tpu.memory_space<vmem>>, vector<1x128xf32>
    %c0_21 = arith.constant 0 : index
    %c0_22 = arith.constant 0 : index
    %41 = vector.load %arg3[%c0_21, %c0_22] : memref<128x128xbf16, #tpu.memory_space<vmem>>, vector<128x128xbf16>
    %cst_23 = arith.constant dense<0.000000e+00> : vector<16x128xf32>
    %42 = tpu.matmul %37, %41, %cst_23 {dimension_numbers = #tpu.dot_dimension_numbers<[1], [0], [0], [1], [0, 0, 1, 1], [], []>} : vector<16x128xbf16>, vector<128x128xbf16>, vector<16x128xf32> -> vector<16x128xf32>
    %43 = vector.broadcast %38 : vector<1x128xf32> to vector<16x128xf32>
    %44 = arith.addf %42, %43 : vector<16x128xf32>
    %cst_24 = arith.constant dense<0.000000e+00> : vector<16xf32>
    %45 = vector.multi_reduction <add>, %44, %cst_24 [1] : vector<16x128xf32> to vector<16xf32>
    %46 = vector.shape_cast %45 : vector<16xf32> to vector<16x1xf32>
    %cst_25 = arith.constant 0.020833334 : f32
    %47 = vector.broadcast %cst_25 : f32 to vector<16x1xf32>
    %48 = arith.mulf %46, %47 : vector<16x1xf32>
    %49 = arith.mulf %44, %44 : vector<16x128xf32>
    %cst_26 = arith.constant dense<0.000000e+00> : vector<16xf32>
    %50 = vector.multi_reduction <add>, %49, %cst_26 [1] : vector<16x128xf32> to vector<16xf32>
    %51 = vector.shape_cast %50 : vector<16xf32> to vector<16x1xf32>
    %cst_27 = arith.constant 0.020833334 : f32
    %52 = vector.broadcast %cst_27 : f32 to vector<16x1xf32>
    %53 = arith.mulf %51, %52 : vector<16x1xf32>
    %54 = arith.mulf %48, %48 : vector<16x1xf32>
    %55 = arith.subf %53, %54 : vector<16x1xf32>
    %cst_28 = arith.constant 0.000000e+00 : f32
    %56 = vector.broadcast %cst_28 : f32 to vector<16x1xf32>
    %57 = arith.maximumf %55, %56 : vector<16x1xf32>
    %58 = vector.broadcast %48 : vector<16x1xf32> to vector<16x128xf32>
    %59 = arith.subf %44, %58 : vector<16x128xf32>
    %cst_29 = arith.constant 9.99999974E-6 : f32
    %60 = vector.broadcast %cst_29 : f32 to vector<16x1xf32>
    %61 = arith.addf %57, %60 : vector<16x1xf32>
    %62 = math.rsqrt %61 : vector<16x1xf32>
    %63 = vector.broadcast %62 : vector<16x1xf32> to vector<16x128xf32>
    %64 = arith.mulf %59, %63 : vector<16x128xf32>
    %65 = vector.broadcast %39 : vector<1x128xf32> to vector<16x128xf32>
    %66 = arith.mulf %64, %65 : vector<16x128xf32>
    %67 = vector.broadcast %40 : vector<1x128xf32> to vector<16x128xf32>
    %68 = arith.addf %66, %67 : vector<16x128xf32>
    %cst_30 = arith.constant 0.000000e+00 : f32
    %69 = vector.broadcast %cst_30 : f32 to vector<16x128xf32>
    %70 = arith.cmpf oge, %68, %69 : vector<16x128xf32>
    %cst_31 = arith.constant 0.00999999977 : f32
    %71 = vector.broadcast %cst_31 : f32 to vector<16x128xf32>
    %72 = arith.mulf %71, %68 : vector<16x128xf32>
    %73 = arith.select %70, %68, %72 : vector<16x128xi1>, vector<16x128xf32>
    %74 = arith.truncf %73 : vector<16x128xf32> to vector<16x128xbf16>
    %c0_32 = arith.constant 0 : index
    %c0_33 = arith.constant 0 : index
    %75 = vector.load %arg10[%c0_32, %c0_33] : memref<3x128xf32, #tpu.memory_space<vmem>>, vector<1x128xf32>
    %c1_34 = arith.constant 1 : index
    %c0_35 = arith.constant 0 : index
    %76 = vector.load %arg10[%c1_34, %c0_35] : memref<3x128xf32, #tpu.memory_space<vmem>>, vector<1x128xf32>
    %c2_36 = arith.constant 2 : index
    %c0_37 = arith.constant 0 : index
    %77 = vector.load %arg10[%c2_36, %c0_37] : memref<3x128xf32, #tpu.memory_space<vmem>>, vector<1x128xf32>
    %c0_38 = arith.constant 0 : index
    %c0_39 = arith.constant 0 : index
    %78 = vector.load %arg4[%c0_38, %c0_39] : memref<128x128xbf16, #tpu.memory_space<vmem>>, vector<128x128xbf16>
    %cst_40 = arith.constant dense<0.000000e+00> : vector<16x128xf32>
    %79 = tpu.matmul %74, %78, %cst_40 {dimension_numbers = #tpu.dot_dimension_numbers<[1], [0], [0], [1], [0, 0, 1, 1], [], []>} : vector<16x128xbf16>, vector<128x128xbf16>, vector<16x128xf32> -> vector<16x128xf32>
    %80 = vector.broadcast %75 : vector<1x128xf32> to vector<16x128xf32>
    %81 = arith.addf %79, %80 : vector<16x128xf32>
    %cst_41 = arith.constant dense<0.000000e+00> : vector<16xf32>
    %82 = vector.multi_reduction <add>, %81, %cst_41 [1] : vector<16x128xf32> to vector<16xf32>
    %83 = vector.shape_cast %82 : vector<16xf32> to vector<16x1xf32>
    %cst_42 = arith.constant 0.0416666679 : f32
    %84 = vector.broadcast %cst_42 : f32 to vector<16x1xf32>
    %85 = arith.mulf %83, %84 : vector<16x1xf32>
    %86 = arith.mulf %81, %81 : vector<16x128xf32>
    %cst_43 = arith.constant dense<0.000000e+00> : vector<16xf32>
    %87 = vector.multi_reduction <add>, %86, %cst_43 [1] : vector<16x128xf32> to vector<16xf32>
    %88 = vector.shape_cast %87 : vector<16xf32> to vector<16x1xf32>
    %cst_44 = arith.constant 0.0416666679 : f32
    %89 = vector.broadcast %cst_44 : f32 to vector<16x1xf32>
    %90 = arith.mulf %88, %89 : vector<16x1xf32>
    %91 = arith.mulf %85, %85 : vector<16x1xf32>
    %92 = arith.subf %90, %91 : vector<16x1xf32>
    %cst_45 = arith.constant 0.000000e+00 : f32
    %93 = vector.broadcast %cst_45 : f32 to vector<16x1xf32>
    %94 = arith.maximumf %92, %93 : vector<16x1xf32>
    %95 = vector.broadcast %85 : vector<16x1xf32> to vector<16x128xf32>
    %96 = arith.subf %81, %95 : vector<16x128xf32>
    %cst_46 = arith.constant 9.99999974E-6 : f32
    %97 = vector.broadcast %cst_46 : f32 to vector<16x1xf32>
    %98 = arith.addf %94, %97 : vector<16x1xf32>
    %99 = math.rsqrt %98 : vector<16x1xf32>
    %100 = vector.broadcast %99 : vector<16x1xf32> to vector<16x128xf32>
    %101 = arith.mulf %96, %100 : vector<16x128xf32>
    %102 = vector.broadcast %76 : vector<1x128xf32> to vector<16x128xf32>
    %103 = arith.mulf %101, %102 : vector<16x128xf32>
    %104 = vector.broadcast %77 : vector<1x128xf32> to vector<16x128xf32>
    %105 = arith.addf %103, %104 : vector<16x128xf32>
    %cst_47 = arith.constant 0.000000e+00 : f32
    %106 = vector.broadcast %cst_47 : f32 to vector<16x128xf32>
    %107 = arith.cmpf oge, %105, %106 : vector<16x128xf32>
    %cst_48 = arith.constant 0.00999999977 : f32
    %108 = vector.broadcast %cst_48 : f32 to vector<16x128xf32>
    %109 = arith.mulf %108, %105 : vector<16x128xf32>
    %110 = arith.select %107, %105, %109 : vector<16x128xi1>, vector<16x128xf32>
    %111 = arith.truncf %110 : vector<16x128xf32> to vector<16x128xbf16>
    %c0_49 = arith.constant 0 : index
    %c0_50 = arith.constant 0 : index
    %112 = vector.load %arg11[%c0_49, %c0_50] : memref<3x128xf32, #tpu.memory_space<vmem>>, vector<1x128xf32>
    %c1_51 = arith.constant 1 : index
    %c0_52 = arith.constant 0 : index
    %113 = vector.load %arg11[%c1_51, %c0_52] : memref<3x128xf32, #tpu.memory_space<vmem>>, vector<1x128xf32>
    %c2_53 = arith.constant 2 : index
    %c0_54 = arith.constant 0 : index
    %114 = vector.load %arg11[%c2_53, %c0_54] : memref<3x128xf32, #tpu.memory_space<vmem>>, vector<1x128xf32>
    %c0_55 = arith.constant 0 : index
    %c0_56 = arith.constant 0 : index
    %115 = vector.load %arg5[%c0_55, %c0_56] : memref<128x128xbf16, #tpu.memory_space<vmem>>, vector<128x128xbf16>
    %cst_57 = arith.constant dense<0.000000e+00> : vector<16x128xf32>
    %116 = tpu.matmul %111, %115, %cst_57 {dimension_numbers = #tpu.dot_dimension_numbers<[1], [0], [0], [1], [0, 0, 1, 1], [], []>} : vector<16x128xbf16>, vector<128x128xbf16>, vector<16x128xf32> -> vector<16x128xf32>
    %117 = vector.broadcast %112 : vector<1x128xf32> to vector<16x128xf32>
    %118 = arith.addf %116, %117 : vector<16x128xf32>
    %cst_58 = arith.constant dense<0.000000e+00> : vector<16xf32>
    %119 = vector.multi_reduction <add>, %118, %cst_58 [1] : vector<16x128xf32> to vector<16xf32>
    %120 = vector.shape_cast %119 : vector<16xf32> to vector<16x1xf32>
    %cst_59 = arith.constant 0.020833334 : f32
    %121 = vector.broadcast %cst_59 : f32 to vector<16x1xf32>
    %122 = arith.mulf %120, %121 : vector<16x1xf32>
    %123 = arith.mulf %118, %118 : vector<16x128xf32>
    %cst_60 = arith.constant dense<0.000000e+00> : vector<16xf32>
    %124 = vector.multi_reduction <add>, %123, %cst_60 [1] : vector<16x128xf32> to vector<16xf32>
    %125 = vector.shape_cast %124 : vector<16xf32> to vector<16x1xf32>
    %cst_61 = arith.constant 0.020833334 : f32
    %126 = vector.broadcast %cst_61 : f32 to vector<16x1xf32>
    %127 = arith.mulf %125, %126 : vector<16x1xf32>
    %128 = arith.mulf %122, %122 : vector<16x1xf32>
    %129 = arith.subf %127, %128 : vector<16x1xf32>
    %cst_62 = arith.constant 0.000000e+00 : f32
    %130 = vector.broadcast %cst_62 : f32 to vector<16x1xf32>
    %131 = arith.maximumf %129, %130 : vector<16x1xf32>
    %132 = vector.broadcast %122 : vector<16x1xf32> to vector<16x128xf32>
    %133 = arith.subf %118, %132 : vector<16x128xf32>
    %cst_63 = arith.constant 9.99999974E-6 : f32
    %134 = vector.broadcast %cst_63 : f32 to vector<16x1xf32>
    %135 = arith.addf %131, %134 : vector<16x1xf32>
    %136 = math.rsqrt %135 : vector<16x1xf32>
    %137 = vector.broadcast %136 : vector<16x1xf32> to vector<16x128xf32>
    %138 = arith.mulf %133, %137 : vector<16x128xf32>
    %139 = vector.broadcast %113 : vector<1x128xf32> to vector<16x128xf32>
    %140 = arith.mulf %138, %139 : vector<16x128xf32>
    %141 = vector.broadcast %114 : vector<1x128xf32> to vector<16x128xf32>
    %142 = arith.addf %140, %141 : vector<16x128xf32>
    %cst_64 = arith.constant 0.000000e+00 : f32
    %143 = vector.broadcast %cst_64 : f32 to vector<16x128xf32>
    %144 = arith.cmpf oge, %142, %143 : vector<16x128xf32>
    %cst_65 = arith.constant 0.00999999977 : f32
    %145 = vector.broadcast %cst_65 : f32 to vector<16x128xf32>
    %146 = arith.mulf %145, %142 : vector<16x128xf32>
    %147 = arith.select %144, %142, %146 : vector<16x128xi1>, vector<16x128xf32>
    %148 = arith.truncf %147 : vector<16x128xf32> to vector<16x128xbf16>
    %c0_66 = arith.constant 0 : index
    %c0_67 = arith.constant 0 : index
    %149 = vector.load %arg12[%c0_66, %c0_67] : memref<3x128xf32, #tpu.memory_space<vmem>>, vector<1x128xf32>
    %c1_68 = arith.constant 1 : index
    %c0_69 = arith.constant 0 : index
    %150 = vector.load %arg12[%c1_68, %c0_69] : memref<3x128xf32, #tpu.memory_space<vmem>>, vector<1x128xf32>
    %c2_70 = arith.constant 2 : index
    %c0_71 = arith.constant 0 : index
    %151 = vector.load %arg12[%c2_70, %c0_71] : memref<3x128xf32, #tpu.memory_space<vmem>>, vector<1x128xf32>
    %c0_72 = arith.constant 0 : index
    %c0_73 = arith.constant 0 : index
    %152 = vector.load %arg6[%c0_72, %c0_73] : memref<128x128xbf16, #tpu.memory_space<vmem>>, vector<128x128xbf16>
    %cst_74 = arith.constant dense<0.000000e+00> : vector<16x128xf32>
    %153 = tpu.matmul %148, %152, %cst_74 {dimension_numbers = #tpu.dot_dimension_numbers<[1], [0], [0], [1], [0, 0, 1, 1], [], []>} : vector<16x128xbf16>, vector<128x128xbf16>, vector<16x128xf32> -> vector<16x128xf32>
    %154 = vector.broadcast %149 : vector<1x128xf32> to vector<16x128xf32>
    %155 = arith.addf %153, %154 : vector<16x128xf32>
    %cst_75 = arith.constant dense<0.000000e+00> : vector<16xf32>
    %156 = vector.multi_reduction <add>, %155, %cst_75 [1] : vector<16x128xf32> to vector<16xf32>
    %157 = vector.shape_cast %156 : vector<16xf32> to vector<16x1xf32>
    %cst_76 = arith.constant 0.013888889 : f32
    %158 = vector.broadcast %cst_76 : f32 to vector<16x1xf32>
    %159 = arith.mulf %157, %158 : vector<16x1xf32>
    %160 = arith.mulf %155, %155 : vector<16x128xf32>
    %cst_77 = arith.constant dense<0.000000e+00> : vector<16xf32>
    %161 = vector.multi_reduction <add>, %160, %cst_77 [1] : vector<16x128xf32> to vector<16xf32>
    %162 = vector.shape_cast %161 : vector<16xf32> to vector<16x1xf32>
    %cst_78 = arith.constant 0.013888889 : f32
    %163 = vector.broadcast %cst_78 : f32 to vector<16x1xf32>
    %164 = arith.mulf %162, %163 : vector<16x1xf32>
    %165 = arith.mulf %159, %159 : vector<16x1xf32>
    %166 = arith.subf %164, %165 : vector<16x1xf32>
    %cst_79 = arith.constant 0.000000e+00 : f32
    %167 = vector.broadcast %cst_79 : f32 to vector<16x1xf32>
    %168 = arith.maximumf %166, %167 : vector<16x1xf32>
    %169 = vector.broadcast %159 : vector<16x1xf32> to vector<16x128xf32>
    %170 = arith.subf %155, %169 : vector<16x128xf32>
    %cst_80 = arith.constant 9.99999974E-6 : f32
    %171 = vector.broadcast %cst_80 : f32 to vector<16x1xf32>
    %172 = arith.addf %168, %171 : vector<16x1xf32>
    %173 = math.rsqrt %172 : vector<16x1xf32>
    %174 = vector.broadcast %173 : vector<16x1xf32> to vector<16x128xf32>
    %175 = arith.mulf %170, %174 : vector<16x128xf32>
    %176 = vector.broadcast %150 : vector<1x128xf32> to vector<16x128xf32>
    %177 = arith.mulf %175, %176 : vector<16x128xf32>
    %178 = vector.broadcast %151 : vector<1x128xf32> to vector<16x128xf32>
    %179 = arith.addf %177, %178 : vector<16x128xf32>
    %cst_81 = arith.constant 0.000000e+00 : f32
    %180 = vector.broadcast %cst_81 : f32 to vector<16x128xf32>
    %181 = arith.cmpf oge, %179, %180 : vector<16x128xf32>
    %cst_82 = arith.constant 0.00999999977 : f32
    %182 = vector.broadcast %cst_82 : f32 to vector<16x128xf32>
    %183 = arith.mulf %182, %179 : vector<16x128xf32>
    %184 = arith.select %181, %179, %183 : vector<16x128xi1>, vector<16x128xf32>
    %185 = arith.truncf %184 : vector<16x128xf32> to vector<16x128xbf16>
    %c0_83 = arith.constant 0 : index
    %c0_84 = arith.constant 0 : index
    %186 = vector.load %arg7[%c0_83, %c0_84] : memref<128x128xbf16, #tpu.memory_space<vmem>>, vector<128x128xbf16>
    %cst_85 = arith.constant dense<0.000000e+00> : vector<16x128xf32>
    %187 = tpu.matmul %185, %186, %cst_85 {dimension_numbers = #tpu.dot_dimension_numbers<[1], [0], [0], [1], [0, 0, 1, 1], [], []>} : vector<16x128xbf16>, vector<128x128xbf16>, vector<16x128xf32> -> vector<16x128xf32>
    %c0_86 = arith.constant 0 : index
    %c0_87 = arith.constant 0 : index
    %188 = vector.load %arg13[%c0_86, %c0_87] : memref<3x128xf32, #tpu.memory_space<vmem>>, vector<1x128xf32>
    %189 = vector.broadcast %188 : vector<1x128xf32> to vector<16x128xf32>
    %190 = arith.addf %187, %189 : vector<16x128xf32>
    %c0_88 = arith.constant 0 : index
    %c0_89 = arith.constant 0 : index
    %191 = vector.load %arg14[%c0_88, %c0_89] : memref<16x128xf32, #tpu.memory_space<vmem>>, vector<16x128xf32>
    tpu.vector_store %arg14[%c0_88, %c0_89], %190 {strides = array<i32>} : memref<16x128xf32, #tpu.memory_space<vmem>>, vector<16x128xf32>,
    return
  }
  func.func @transform_0(%arg0: i32) -> (i32, i32) {
    %c0_i32 = arith.constant 0 : i32
    %c0_i32_0 = arith.constant 0 : i32
    return %arg0, %c0_i32 : i32, i32
  }
  func.func @transform_1(%arg0: i32) -> (i32, i32) {
    %c0_i32 = arith.constant 0 : i32
    %c0_i32_0 = arith.constant 0 : i32
    %c0_i32_1 = arith.constant 0 : i32
    return %c0_i32, %c0_i32_0 : i32, i32
  }
  func.func @transform_2(%arg0: i32) -> (i32, i32) {
    %c0_i32 = arith.constant 0 : i32
    %c0_i32_0 = arith.constant 0 : i32
    %c0_i32_1 = arith.constant 0 : i32
    return %c0_i32, %c0_i32_0 : i32, i32
  }
  func.func @transform_3(%arg0: i32) -> (i32, i32) {
    %c0_i32 = arith.constant 0 : i32
    %c0_i32_0 = arith.constant 0 : i32
    %c0_i32_1 = arith.constant 0 : i32
    return %c0_i32, %c0_i32_0 : i32, i32
  }
  func.func @transform_4(%arg0: i32) -> (i32, i32) {
    %c0_i32 = arith.constant 0 : i32
    %c0_i32_0 = arith.constant 0 : i32
    %c0_i32_1 = arith.constant 0 : i32
    return %c0_i32, %c0_i32_0 : i32, i32
  }
  func.func @transform_5(%arg0: i32) -> (i32, i32) {
    %c0_i32 = arith.constant 0 : i32
    %c0_i32_0 = arith.constant 0 : i32
    %c0_i32_1 = arith.constant 0 : i32
    return %c0_i32, %c0_i32_0 : i32, i32
  }
  func.func @transform_6(%arg0: i32) -> (i32, i32) {
    %c0_i32 = arith.constant 0 : i32
    %c0_i32_0 = arith.constant 0 : i32
    %c0_i32_1 = arith.constant 0 : i32
    return %c0_i32, %c0_i32_0 : i32, i32
  }
  func.func @transform_7(%arg0: i32) -> (i32, i32) {
    %c0_i32 = arith.constant 0 : i32
    %c0_i32_0 = arith.constant 0 : i32
    %c0_i32_1 = arith.constant 0 : i32
    return %c0_i32, %c0_i32_0 : i32, i32
  }
  func.func @transform_8(%arg0: i32) -> (i32, i32) {
    %c0_i32 = arith.constant 0 : i32
    %c0_i32_0 = arith.constant 0 : i32
    %c0_i32_1 = arith.constant 0 : i32
    return %c0_i32, %c0_i32_0 : i32, i32
  }
  func.func @transform_9(%arg0: i32) -> (i32, i32) {
    %c0_i32 = arith.constant 0 : i32
    %c0_i32_0 = arith.constant 0 : i32
    %c0_i32_1 = arith.constant 0 : i32
    return %c0_i32, %c0_i32_0 : i32, i32
  }
  func.func @transform_10(%arg0: i32) -> (i32, i32) {
    %c0_i32 = arith.constant 0 : i32
    %c0_i32_0 = arith.constant 0 : i32
    %c0_i32_1 = arith.constant 0 : i32
    return %c0_i32, %c0_i32_0 : i32, i32
  }
  func.func @transform_11(%arg0: i32) -> (i32, i32) {
    %c0_i32 = arith.constant 0 : i32
    %c0_i32_0 = arith.constant 0 : i32
    %c0_i32_1 = arith.constant 0 : i32
    return %c0_i32, %c0_i32_0 : i32, i32
  }
  func.func @transform_12(%arg0: i32) -> (i32, i32) {
    %c0_i32 = arith.constant 0 : i32
    %c0_i32_0 = arith.constant 0 : i32
    %c0_i32_1 = arith.constant 0 : i32
    return %c0_i32, %c0_i32_0 : i32, i32
  }
  func.func @transform_13(%arg0: i32) -> (i32, i32) {
    %c0_i32 = arith.constant 0 : i32
    %c0_i32_0 = arith.constant 0 : i32
    return %arg0, %c0_i32 : i32, i32
  }
}

</mosaic_0001>

<llo_original>
// kernel: _mlp_forward_impl.1
$region0: #{_mlp_forward_impl.1}
  #allocation0 [shape = 'u32[]', space=smem, size = 0x4, offset = 0x4, fixed_abs, tag = 'smem constant byte address 0x4 - core index']
  #allocation1 [shape = 'u32[144,128]{1,0:T(1,128)}', space=vmem, size = 0x12000, scoped, tag = 'internal scratch']
  %s0 = inlined_call_operand.hbm [shape: bf16[16,128], index: 0, kind: input, shape index: {}]
  %s1 = inlined_call_operand.hbm [shape: bf16[128,128], index: 1, kind: input, shape index: {}]
  %s2 = inlined_call_operand.hbm [shape: bf16[128,128], index: 2, kind: input, shape index: {}]
  %s3 = inlined_call_operand.hbm [shape: bf16[128,128], index: 3, kind: input, shape index: {}]
  %s4 = inlined_call_operand.hbm [shape: bf16[128,128], index: 4, kind: input, shape index: {}]
  %s5 = inlined_call_operand.hbm [shape: bf16[128,128], index: 5, kind: input, shape index: {}]
  %s6 = inlined_call_operand.hbm [shape: bf16[128,128], index: 6, kind: input, shape index: {}]
  %s7 = inlined_call_operand.hbm [shape: f32[3,128], index: 7, kind: input, shape index: {}]
  %s8 = inlined_call_operand.hbm [shape: f32[3,128], index: 8, kind: input, shape index: {}]
  %s9 = inlined_call_operand.hbm [shape: f32[3,128], index: 9, kind: input, shape index: {}]
  %s10 = inlined_call_operand.hbm [shape: f32[3,128], index: 10, kind: input, shape index: {}]
  %s11 = inlined_call_operand.hbm [shape: f32[3,128], index: 11, kind: input, shape index: {}]
  %s12 = inlined_call_operand.hbm [shape: f32[3,128], index: 12, kind: input, shape index: {}]
  %s13 = inlined_call_operand.hbm [shape: f32[16,128], index: 13, kind: output, shape index: {}]
  %s14 = sld [smem:[#allocation0]]
  $region114: #{_mlp_forward_impl.1} parent=0
    _
  %s16 = ssub.s32 1, %s14
  %s17 = scalar_select 0, %s16, %s14
  $region1: #{_mlp_forward_impl.1} parent=0
    #allocation2 [shape = 'u8[4096]{0}', space=vmem, size = 0x1000, scoped, tag = 'input window, operand 0, single buffered']
    #allocation3 [shape = 's32[1]{0}', space=sflag, size = 0x4, scoped, tag = 'scoped memory for _mlp_forward_impl.1']
    #allocation4 [shape = 's32[1]{0}', space=sflag, size = 0x4, scoped, tag = 'scoped memory for _mlp_forward_impl.1']
    #allocation5 [shape = 'u8[32768]{0}', space=vmem, size = 0x8000, scoped, tag = 'input window, operand 1, single buffered']
    #allocation6 [shape = 's32[1]{0}', space=sflag, size = 0x4, scoped, tag = 'scoped memory for _mlp_forward_impl.1']
    #allocation7 [shape = 'u8[32768]{0}', space=vmem, size = 0x8000, scoped, tag = 'input window, operand 2, single buffered']
    #allocation8 [shape = 'u8[32768]{0}', space=vmem, size = 0x8000, scoped, tag = 'input window, operand 3, single buffered']
    #allocation9 [shape = 's32[1]{0}', space=sflag, size = 0x4, scoped, tag = 'scoped memory for _mlp_forward_impl.1']
    #allocation10 [shape = 'u8[32768]{0}', space=vmem, size = 0x8000, scoped, tag = 'input window, operand 4, single buffered']
    #allocation11 [shape = 'u8[32768]{0}', space=vmem, size = 0x8000, scoped, tag = 'input window, operand 5, single buffered']
    #allocation12 [shape = 's32[1]{0}', space=sflag, size = 0x4, scoped, tag = 'scoped memory for _mlp_forward_impl.1']
    #allocation13 [shape = 'u8[32768]{0}', space=vmem, size = 0x8000, scoped, tag = 'input window, operand 6, single buffered']
    #allocation14 [shape = 'u8[2048]{0}', space=vmem, size = 0x800, scoped, tag = 'input window, operand 7, single buffered']
    #allocation15 [shape = 's32[1]{0}', space=sflag, size = 0x4, scoped, tag = 'scoped memory for _mlp_forward_impl.1']
    #allocation16 [shape = 'u8[2048]{0}', space=vmem, size = 0x800, scoped, tag = 'input window, operand 8, single buffered']
    #allocation17 [shape = 'u8[2048]{0}', space=vmem, size = 0x800, scoped, tag = 'input window, operand 9, single buffered']
    #allocation18 [shape = 's32[1]{0}', space=sflag, size = 0x4, scoped, tag = 'scoped memory for _mlp_forward_impl.1']
    #allocation19 [shape = 'u8[2048]{0}', space=vmem, size = 0x800, scoped, tag = 'input window, operand 10, single buffered']
    #allocation20 [shape = 'u8[2048]{0}', space=vmem, size = 0x800, scoped, tag = 'input window, operand 11, single buffered']
    #allocation21 [shape = 's32[1]{0}', space=sflag, size = 0x4, scoped, tag = 'scoped memory for _mlp_forward_impl.1']
    #allocation22 [shape = 'u8[2048]{0}', space=vmem, size = 0x800, scoped, tag = 'input window, operand 12, single buffered']
    #allocation23 [shape = 'u8[8192]{0}', space=vmem, size = 0x2000, scoped, tag = 'output window, operand 0, single buffered']
    %18 = vsyncpa [#allocation3], 0
    %19 = vsyncpa [#allocation6], 0
    %20 = vsyncpa [#allocation9], 0
    %21 = vsyncpa [#allocation12], 0
    %22 = vsyncpa [#allocation15], 0
    %23 = vsyncpa [#allocation18], 0
    %24 = vsyncpa [#allocation21], 0
    %25 = vsyncpa [#allocation4], 0
    // Predicated region
    $region2: #{_mlp_forward_impl.1} parent=1 // pred_check
      _
    $region3: #{_mlp_forward_impl.1} parent=1 // pred_check_branch
      %27 = sbr.rel (0) target = $region5
    $region4: #{_mlp_forward_impl.1} parent=1 // pred_region
      %s29 = ssub.s32 128, 128
      %30 = vsyncadd [#allocation3], %s29
      %s31 = sshll.u32 [#allocation2], 4
      %s32 = int_to_ptr.vmem [resolvable:$true] %s31
      %37 = dma.hbm_to_vmem [thread:$0]  %s0, 128, %s32, [#allocation3], 64, 64, 4
    $region5: #{_mlp_forward_impl.1} parent=1 // pred_fallthru
      _
    // Predicated region
    $region6: #{_mlp_forward_impl.1} parent=1 // pred_check
      _
    $region7: #{_mlp_forward_impl.1} parent=1 // pred_check_branch
      %39 = sbr.rel (0) target = $region9
    $region8: #{_mlp_forward_impl.1} parent=1 // pred_region
      %s41 = ssub.s32 1024, 1024
      %42 = vsyncadd [#allocation6], %s41
      %s43 = sshll.u32 [#allocation5], 4
      %s44 = int_to_ptr.vmem [resolvable:$true] %s43
      %49 = dma.hbm_to_vmem [thread:$0]  %s1, 1024, %s44, [#allocation6], 64, 64, 4
    $region9: #{_mlp_forward_impl.1} parent=1 // pred_fallthru
      _
    // Predicated region
    $region10: #{_mlp_forward_impl.1} parent=1 // pred_check
      _
    $region11: #{_mlp_forward_impl.1} parent=1 // pred_check_branch
      %51 = sbr.rel (0) target = $region13
    $region12: #{_mlp_forward_impl.1} parent=1 // pred_region
      %s53 = ssub.s32 1024, 1024
      %54 = vsyncadd [#allocation6], %s53
      %s55 = sshll.u32 [#allocation7], 4
      %s56 = int_to_ptr.vmem [resolvable:$true] %s55
      %61 = dma.hbm_to_vmem [thread:$0]  %s2, 1024, %s56, [#allocation6], 64, 64, 4
    $region13: #{_mlp_forward_impl.1} parent=1 // pred_fallthru
      _
    // Predicated region
    $region14: #{_mlp_forward_impl.1} parent=1 // pred_check
      _
    $region15: #{_mlp_forward_impl.1} parent=1 // pred_check_branch
      %63 = sbr.rel (0) target = $region17
    $region16: #{_mlp_forward_impl.1} parent=1 // pred_region
      %s65 = ssub.s32 1024, 1024
      %66 = vsyncadd [#allocation9], %s65
      %s67 = sshll.u32 [#allocation8], 4
      %s68 = int_to_ptr.vmem [resolvable:$true] %s67
      %73 = dma.hbm_to_vmem [thread:$0]  %s3, 1024, %s68, [#allocation9], 64, 64, 4
    $region17: #{_mlp_forward_impl.1} parent=1 // pred_fallthru
      _
    // Predicated region
    $region18: #{_mlp_forward_impl.1} parent=1 // pred_check
      _
    $region19: #{_mlp_forward_impl.1} parent=1 // pred_check_branch
      %75 = sbr.rel (0) target = $region21
    $region20: #{_mlp_forward_impl.1} parent=1 // pred_region
      %s77 = ssub.s32 1024, 1024
      %78 = vsyncadd [#allocation9], %s77
      %s79 = sshll.u32 [#allocation10], 4
      %s80 = int_to_ptr.vmem [resolvable:$true] %s79
      %85 = dma.hbm_to_vmem [thread:$0]  %s4, 1024, %s80, [#allocation9], 64, 64, 4
    $region21: #{_mlp_forward_impl.1} parent=1 // pred_fallthru
      _
    // Predicated region
    $region22: #{_mlp_forward_impl.1} parent=1 // pred_check
      _
    $region23: #{_mlp_forward_impl.1} parent=1 // pred_check_branch
      %87 = sbr.rel (0) target = $region25
    $region24: #{_mlp_forward_impl.1} parent=1 // pred_region
      %s89 = ssub.s32 1024, 1024
      %90 = vsyncadd [#allocation12], %s89
      %s91 = sshll.u32 [#allocation11], 4
      %s92 = int_to_ptr.vmem [resolvable:$true] %s91
      %97 = dma.hbm_to_vmem [thread:$0]  %s5, 1024, %s92, [#allocation12], 64, 64, 4
    $region25: #{_mlp_forward_impl.1} parent=1 // pred_fallthru
      _
    // Predicated region
    $region26: #{_mlp_forward_impl.1} parent=1 // pred_check
      _
    $region27: #{_mlp_forward_impl.1} parent=1 // pred_check_branch
      %99 = sbr.rel (0) target = $region29
    $region28: #{_mlp_forward_impl.1} parent=1 // pred_region
      %s101 = ssub.s32 1024, 1024
      %102 = vsyncadd [#allocation12], %s101
      %s103 = sshll.u32 [#allocation13], 4
      %s104 = int_to_ptr.vmem [resolvable:$true] %s103
      %109 = dma.hbm_to_vmem [thread:$0]  %s6, 1024, %s104, [#allocation12], 64, 64, 4
    $region29: #{_mlp_forward_impl.1} parent=1 // pred_fallthru
      _
    // Predicated region
    $region30: #{_mlp_forward_impl.1} parent=1 // pred_check
      _
    $region31: #{_mlp_forward_impl.1} parent=1 // pred_check_branch
      %111 = sbr.rel (0) target = $region33
    $region32: #{_mlp_forward_impl.1} parent=1 // pred_region
      %s113 = ssub.s32 64, 64
      %114 = vsyncadd [#allocation15], %s113
      %s116 = sshll.u32 [#allocation14], 4
      %s117 = int_to_ptr.vmem [resolvable:$true] %s116
      %119 = dma.hbm_to_vmem [thread:$0]  %s7, 64, %s117, [#allocation15]
    $region33: #{_mlp_forward_impl.1} parent=1 // pred_fallthru
      _
    // Predicated region
    $region34: #{_mlp_forward_impl.1} parent=1 // pred_check
      _
    $region35: #{_mlp_forward_impl.1} parent=1 // pred_check_branch
      %121 = sbr.rel (0) target = $region37
    $region36: #{_mlp_forward_impl.1} parent=1 // pred_region
      %s123 = ssub.s32 64, 64
      %124 = vsyncadd [#allocation15], %s123
      %s126 = sshll.u32 [#allocation16], 4
      %s127 = int_to_ptr.vmem [resolvable:$true] %s126
      %129 = dma.hbm_to_vmem [thread:$0]  %s8, 64, %s127, [#allocation15]
    $region37: #{_mlp_forward_impl.1} parent=1 // pred_fallthru
      _
    // Predicated region
    $region38: #{_mlp_forward_impl.1} parent=1 // pred_check
      _
    $region39: #{_mlp_forward_impl.1} parent=1 // pred_check_branch
      %131 = sbr.rel (0) target = $region41
    $region40: #{_mlp_forward_impl.1} parent=1 // pred_region
      %s133 = ssub.s32 64, 64
      %134 = vsyncadd [#allocation18], %s133
      %s136 = sshll.u32 [#allocation17], 4
      %s137 = int_to_ptr.vmem [resolvable:$true] %s136
      %139 = dma.hbm_to_vmem [thread:$0]  %s9, 64, %s137, [#allocation18]
    $region41: #{_mlp_forward_impl.1} parent=1 // pred_fallthru
      _
    // Predicated region
    $region42: #{_mlp_forward_impl.1} parent=1 // pred_check
      _
    $region43: #{_mlp_forward_impl.1} parent=1 // pred_check_branch
      %141 = sbr.rel (0) target = $region45
    $region44: #{_mlp_forward_impl.1} parent=1 // pred_region
      %s143 = ssub.s32 64, 64
      %144 = vsyncadd [#allocation18], %s143
      %s146 = sshll.u32 [#allocation19], 4
      %s147 = int_to_ptr.vmem [resolvable:$true] %s146
      %149 = dma.hbm_to_vmem [thread:$0]  %s10, 64, %s147, [#allocation18]
    $region45: #{_mlp_forward_impl.1} parent=1 // pred_fallthru
      _
    // Predicated region
    $region46: #{_mlp_forward_impl.1} parent=1 // pred_check
      _
    $region47: #{_mlp_forward_impl.1} parent=1 // pred_check_branch
      %151 = sbr.rel (0) target = $region49
    $region48: #{_mlp_forward_impl.1} parent=1 // pred_region
      %s153 = ssub.s32 64, 64
      %154 = vsyncadd [#allocation21], %s153
      %s156 = sshll.u32 [#allocation20], 4
      %s157 = int_to_ptr.vmem [resolvable:$true] %s156
      %159 = dma.hbm_to_vmem [thread:$0]  %s11, 64, %s157, [#allocation21]
    $region49: #{_mlp_forward_impl.1} parent=1 // pred_fallthru
      _
    // Predicated region
    $region50: #{_mlp_forward_impl.1} parent=1 // pred_check
      _
    $region51: #{_mlp_forward_impl.1} parent=1 // pred_check_branch
      %161 = sbr.rel (0) target = $region53
    $region52: #{_mlp_forward_impl.1} parent=1 // pred_region
      %s163 = ssub.s32 64, 64
      %164 = vsyncadd [#allocation21], %s163
      %s166 = sshll.u32 [#allocation22], 4
      %s167 = int_to_ptr.vmem [resolvable:$true] %s166
      %169 = dma.hbm_to_vmem [thread:$0]  %s12, 64, %s167, [#allocation21]
    $region53: #{_mlp_forward_impl.1} parent=1 // pred_fallthru
      _
    // Predicated region
    $region54: #{_mlp_forward_impl.1} parent=1 // pred_check
      _
    $region55: #{_mlp_forward_impl.1} parent=1 // pred_check_branch
      %171 = sbr.rel (0) target = $region57
    $region56: #{_mlp_forward_impl.1} parent=1 // pred_region
      %172 = dma.done [#allocation3], 128
    $region57: #{_mlp_forward_impl.1} parent=1 // pred_fallthru
      _
    // Predicated region
    $region58: #{_mlp_forward_impl.1} parent=1 // pred_check
      _
    $region59: #{_mlp_forward_impl.1} parent=1 // pred_check_branch
      %174 = sbr.rel (0) target = $region61
    $region60: #{_mlp_forward_impl.1} parent=1 // pred_region
      %175 = dma.done [#allocation6], 1024
    $region61: #{_mlp_forward_impl.1} parent=1 // pred_fallthru
      _
    // Predicated region
    $region62: #{_mlp_forward_impl.1} parent=1 // pred_check
      _
    $region63: #{_mlp_forward_impl.1} parent=1 // pred_check_branch
      %177 = sbr.rel (0) target = $region65
    $region64: #{_mlp_forward_impl.1} parent=1 // pred_region
      %178 = dma.done [#allocation6], 1024
    $region65: #{_mlp_forward_impl.1} parent=1 // pred_fallthru
      _
    // Predicated region
    $region66: #{_mlp_forward_impl.1} parent=1 // pred_check
      _
    $region67: #{_mlp_forward_impl.1} parent=1 // pred_check_branch
      %180 = sbr.rel (0) target = $region69
    $region68: #{_mlp_forward_impl.1} parent=1 // pred_region
      %181 = dma.done [#allocation9], 1024
    $region69: #{_mlp_forward_impl.1} parent=1 // pred_fallthru
      _
    // Predicated region
    $region70: #{_mlp_forward_impl.1} parent=1 // pred_check
      _
    $region71: #{_mlp_forward_impl.1} parent=1 // pred_check_branch
      %183 = sbr.rel (0) target = $region73
    $region72: #{_mlp_forward_impl.1} parent=1 // pred_region
      %184 = dma.done [#allocation9], 1024
    $region73: #{_mlp_forward_impl.1} parent=1 // pred_fallthru
      _
    // Predicated region
    $region74: #{_mlp_forward_impl.1} parent=1 // pred_check
      _
    $region75: #{_mlp_forward_impl.1} parent=1 // pred_check_branch
      %186 = sbr.rel (0) target = $region77
    $region76: #{_mlp_forward_impl.1} parent=1 // pred_region
      %187 = dma.done [#allocation12], 1024
    $region77: #{_mlp_forward_impl.1} parent=1 // pred_fallthru
      _
    // Predicated region
    $region78: #{_mlp_forward_impl.1} parent=1 // pred_check
      _
    $region79: #{_mlp_forward_impl.1} parent=1 // pred_check_branch
      %189 = sbr.rel (0) target = $region81
    $region80: #{_mlp_forward_impl.1} parent=1 // pred_region
      %190 = dma.done [#allocation12], 1024
    $region81: #{_mlp_forward_impl.1} parent=1 // pred_fallthru
      _
    // Predicated region
    $region82: #{_mlp_forward_impl.1} parent=1 // pred_check
      _
    $region83: #{_mlp_forward_impl.1} parent=1 // pred_check_branch
      %192 = sbr.rel (0) target = $region85
    $region84: #{_mlp_forward_impl.1} parent=1 // pred_region
      %193 = dma.done [#allocation15], 64
    $region85: #{_mlp_forward_impl.1} parent=1 // pred_fallthru
      _
    // Predicated region
    $region86: #{_mlp_forward_impl.1} parent=1 // pred_check
      _
    $region87: #{_mlp_forward_impl.1} parent=1 // pred_check_branch
      %195 = sbr.rel (0) target = $region89
    $region88: #{_mlp_forward_impl.1} parent=1 // pred_region
      %196 = dma.done [#allocation15], 64
    $region89: #{_mlp_forward_impl.1} parent=1 // pred_fallthru
      _
    // Predicated region
    $region90: #{_mlp_forward_impl.1} parent=1 // pred_check
      _
    $region91: #{_mlp_forward_impl.1} parent=1 // pred_check_branch
      %198 = sbr.rel (0) target = $region93
    $region92: #{_mlp_forward_impl.1} parent=1 // pred_region
      %199 = dma.done [#allocation18], 64
    $region93: #{_mlp_forward_impl.1} parent=1 // pred_fallthru
      _
    // Predicated region
    $region94: #{_mlp_forward_impl.1} parent=1 // pred_check
      _
    $region95: #{_mlp_forward_impl.1} parent=1 // pred_check_branch
      %201 = sbr.rel (0) target = $region97
    $region96: #{_mlp_forward_impl.1} parent=1 // pred_region
      %202 = dma.done [#allocation18], 64
    $region97: #{_mlp_forward_impl.1} parent=1 // pred_fallthru
      _
    // Predicated region
    $region98: #{_mlp_forward_impl.1} parent=1 // pred_check
      _
    $region99: #{_mlp_forward_impl.1} parent=1 // pred_check_branch
      %204 = sbr.rel (0) target = $region101
    $region100: #{_mlp_forward_impl.1} parent=1 // pred_region
      %205 = dma.done [#allocation21], 64
    $region101: #{_mlp_forward_impl.1} parent=1 // pred_fallthru
      _
    // Predicated region
    $region102: #{_mlp_forward_impl.1} parent=1 // pred_check
      _
    $region103: #{_mlp_forward_impl.1} parent=1 // pred_check_branch
      %207 = sbr.rel (0) target = $region105
    $region104: #{_mlp_forward_impl.1} parent=1 // pred_region
      %208 = dma.done [#allocation21], 64
    $region105: #{_mlp_forward_impl.1} parent=1 // pred_fallthru
      _
    %v210 = vld [vmem:[#allocation2] sm:$0xf]
    %v211 = vld [vmem:[#allocation2 + $0x4] sm:$0xf]
    %v212 = vld [vmem:[#allocation14] sm:$0x1]
    %v213 = vld [vmem:[#allocation14 + $0x1] sm:$0x1]
    %v214 = vld [vmem:[#allocation14 + $0x2] sm:$0x1]
    %v215 = vld [vmem:[#allocation5] sm:$0xf]
    %v216 = vld [vmem:[#allocation5 + $0x4] sm:$0xf]
    %v217 = vld [vmem:[#allocation5 + $0x8] sm:$0xf]
    %v218 = vld [vmem:[#allocation5 + $0xc] sm:$0xf]
    %v219 = vld [vmem:[#allocation5 + $0x10] sm:$0xf]
    %v220 = vld [vmem:[#allocation5 + $0x14] sm:$0xf]
    %v221 = vld [vmem:[#allocation5 + $0x18] sm:$0xf]
    %v222 = vld [vmem:[#allocation5 + $0x1c] sm:$0xf]
    %v223 = vld [vmem:[#allocation5 + $0x20] sm:$0xf]
    %v224 = vld [vmem:[#allocation5 + $0x24] sm:$0xf]
    %v225 = vld [vmem:[#allocation5 + $0x28] sm:$0xf]
    %v226 = vld [vmem:[#allocation5 + $0x2c] sm:$0xf]
    %v227 = vld [vmem:[#allocation5 + $0x30] sm:$0xf]
    %v228 = vld [vmem:[#allocation5 + $0x34] sm:$0xf]
    %v229 = vld [vmem:[#allocation5 + $0x38] sm:$0xf]
    %v230 = vld [vmem:[#allocation5 + $0x3c] sm:$0xf]
    %v231 = vlaneseq
    %v232 = vshrl.u32 %v231, 7
    %v233 = vsub.s32 0, %v232
    %v234 = vrot.slane %v212, %v233
    %v237 = vunpack.c.l.b16 %v210
    %v238 = vunpack.c.l.b16 %v211
    %v239 = vpack.c.b16 %v238, %v237
    %v257 = vunpack.c.l.b16 %v215
    %v258 = vunpack.c.l.b16 %v216
    %v259 = vunpack.c.l.b16 %v217
    %v260 = vunpack.c.l.b16 %v218
    %v261 = vunpack.c.l.b16 %v219
    %v262 = vunpack.c.l.b16 %v220
    %v263 = vunpack.c.l.b16 %v221
    %v264 = vunpack.c.l.b16 %v222
    %v265 = vunpack.c.l.b16 %v223
    %v266 = vunpack.c.l.b16 %v224
    %v267 = vunpack.c.l.b16 %v225
    %v268 = vunpack.c.l.b16 %v226
    %v269 = vunpack.c.l.b16 %v227
    %v270 = vunpack.c.l.b16 %v228
    %v271 = vunpack.c.l.b16 %v229
    %v272 = vunpack.c.l.b16 %v230
    %v273 = vpack.c.b16 %v258, %v257
    %v274 = vpack.c.b16 %v260, %v259
    %v275 = vpack.c.b16 %v262, %v261
    %v276 = vpack.c.b16 %v264, %v263
    %v277 = vpack.c.b16 %v266, %v265
    %v278 = vpack.c.b16 %v268, %v267
    %v279 = vpack.c.b16 %v270, %v269
    %v280 = vpack.c.b16 %v272, %v271
    %289 = vmatprep.subr.bf16.mxu0 0
    %290 = vmatpush1.bf16.msra.mxu0 %v273
    %291 = vmatprep.subr.bf16.mxu0 0
    %292 = vmatpush1.bf16.msra.mxu0 %v274
    %293 = vmatprep.subr.bf16.mxu0 0
    %294 = vmatpush1.bf16.msra.mxu0 %v275
    %295 = vmatprep.subr.bf16.mxu0 0
    %296 = vmatpush1.bf16.msra.mxu0 %v276
    %297 = vmatprep.subr.bf16.mxu0 0
    %298 = vmatpush1.bf16.msra.mxu0 %v277
    %299 = vmatprep.subr.bf16.mxu0 0
    %300 = vmatpush1.bf16.msra.mxu0 %v278
    %301 = vmatprep.subr.bf16.mxu0 0
    %302 = vmatpush1.bf16.msra.mxu0 %v279
    %303 = vmatprep.subr.bf16.mxu0 0
    %304 = vmatpush1.bf16.msra.mxu0 %v280
    %305 = vmatprep.subr.bf16.mxu0 0
    %306 = vmatpush1.bf16.msra.mxu0 0
    %307 = vmatprep.subr.bf16.mxu0 0
    %308 = vmatpush1.bf16.msra.mxu0 0
    %309 = vmatprep.subr.bf16.mxu0 0
    %310 = vmatpush1.bf16.msra.mxu0 0
    %311 = vmatprep.subr.bf16.mxu0 0
    %312 = vmatpush1.bf16.msra.mxu0 0
    %313 = vmatprep.subr.bf16.mxu0 0
    %314 = vmatpush1.bf16.msra.mxu0 0
    %315 = vmatprep.subr.bf16.mxu0 0
    %316 = vmatpush1.bf16.msra.mxu0 0
    %317 = vmatprep.subr.bf16.mxu0 0
    %318 = vmatpush1.bf16.msra.mxu0 0
    %319 = vmatprep.subr.bf16.mxu0 0
    %320 = vmatpush1.bf16.msra.mxu0 0
    %321 = vmatprep.mubr.bf16.mxu0 0
    %322 = vmatmul.mubr.bf16.gmra.mrb[0].mxu0 %v239
    %v323 = vpop.f32.mrb[0].mxu0
    %v324 = vadd.f32 %v234, %v323
    %v325 = vpop.f32.mrb[0].mxu0
    %v326 = vpop.f32.mrb[0].mxu0
    %v327 = vadd.f32 %v234, %v326
    %v328 = vpop.f32.mrb[0].mxu0
    %329 = vdwg.mxu0
    %330 = vadd.xlane.f32.xlu0 %v324
    %v331 = vpop.xlane.xlu0 %330
    %332 = vadd.xlane.f32.xlu0 %v327
    %v333 = vpop.xlane.xlu0 %332
    %v334 = vmul.f32 %v331, 0.013888889
    %v335 = vmul.f32 %v333, 0.013888889
    %v336 = vmul.f32 %v324, %v324
    %v337 = vmul.f32 %v327, %v327
    %338 = vadd.xlane.f32.xlu0 %v336
    %v339 = vpop.xlane.xlu0 %338
    %340 = vadd.xlane.f32.xlu0 %v337
    %v341 = vpop.xlane.xlu0 %340
    %v342 = vmul.f32 %v339, 0.013888889
    %v343 = vmul.f32 %v341, 0.013888889
    %v344 = vmul.f32 %v334, %v334
    %v345 = vmul.f32 %v335, %v335
    %v346 = vsub.f32 %v342, %v344
    %v347 = vsub.f32 %v343, %v345
    %v348 = vmax.f32 %v346, 0.0
    %v349 = vmax.f32 %v347, 0.0
    %v350 = vsub.f32 %v324, %v334
    %v351 = vsub.f32 %v327, %v335
    %v352 = vadd.f32 %v348, 1e-05
    %v353 = vadd.f32 %v349, 1e-05
    %v354 = vrsqrt.pop %v352
    %v355 = vrsqrt.pop %v353
    %v356 = vmul.f32 %v350, %v354
    %v357 = vmul.f32 %v351, %v355
    %v358 = vlaneseq
    %v359 = vshrl.u32 %v358, 7
    %v360 = vsub.s32 0, %v359
    %v361 = vrot.slane %v213, %v360
    %v362 = vmul.f32 %v356, %v361
    %v363 = vmul.f32 %v357, %v361
    %v364 = vlaneseq
    %v365 = vshrl.u32 %v364, 7
    %v366 = vsub.s32 0, %v365
    %v367 = vrot.slane %v214, %v366
    %v368 = vadd.f32 %v362, %v367
    %v369 = vadd.f32 %v363, %v367
    %vm370 = vcmp.ge.f32.partialorder %v368, 0.0
    %vm371 = vcmp.ge.f32.partialorder %v369, 0.0
    %v372 = vmul.f32 %v368, 0.01
    %v373 = vmul.f32 %v369, 0.01
    %v374 = vsel %vm370, %v368, %v372
    %v375 = vsel %vm371, %v369, %v373
    %v376 = vpack.c.bf16 %v375, %v374
    %v377 = vld [vmem:[#allocation16] sm:$0x1]
    %v378 = vld [vmem:[#allocation16 + $0x1] sm:$0x1]
    %v379 = vld [vmem:[#allocation16 + $0x2] sm:$0x1]
    %v380 = vld [vmem:[#allocation7] sm:$0xf]
    %v381 = vld [vmem:[#allocation7 + $0x4] sm:$0xf]
    %v382 = vld [vmem:[#allocation7 + $0x8] sm:$0xf]
    %v383 = vld [vmem:[#allocation7 + $0xc] sm:$0xf]
    %v384 = vld [vmem:[#allocation7 + $0x10] sm:$0xf]
    %v385 = vld [vmem:[#allocation7 + $0x14] sm:$0xf]
    %v386 = vld [vmem:[#allocation7 + $0x18] sm:$0xf]
    %v387 = vld [vmem:[#allocation7 + $0x1c] sm:$0xf]
    %v388 = vld [vmem:[#allocation7 + $0x20] sm:$0xf]
    %v389 = vld [vmem:[#allocation7 + $0x24] sm:$0xf]
    %v390 = vld [vmem:[#allocation7 + $0x28] sm:$0xf]
    %v391 = vld [vmem:[#allocation7 + $0x2c] sm:$0xf]
    %v392 = vld [vmem:[#allocation7 + $0x30] sm:$0xf]
    %v393 = vld [vmem:[#allocation7 + $0x34] sm:$0xf]
    %v394 = vld [vmem:[#allocation7 + $0x38] sm:$0xf]
    %v395 = vld [vmem:[#allocation7 + $0x3c] sm:$0xf]
    %v396 = vlaneseq
    %v397 = vshrl.u32 %v396, 7
    %v398 = vsub.s32 0, %v397
    %v399 = vrot.slane %v377, %v398
    %v416 = vunpack.c.l.b16 %v380
    %v417 = vunpack.c.l.b16 %v381
    %v418 = vunpack.c.l.b16 %v382
    %v419 = vunpack.c.l.b16 %v383
    %v420 = vunpack.c.l.b16 %v384
    %v421 = vunpack.c.l.b16 %v385
    %v422 = vunpack.c.l.b16 %v386
    %v423 = vunpack.c.l.b16 %v387
    %v424 = vunpack.c.l.b16 %v388
    %v425 = vunpack.c.l.b16 %v389
    %v426 = vunpack.c.l.b16 %v390
    %v427 = vunpack.c.l.b16 %v391
    %v428 = vunpack.c.l.b16 %v392
    %v429 = vunpack.c.l.b16 %v393
    %v430 = vunpack.c.l.b16 %v394
    %v431 = vunpack.c.l.b16 %v395
    %v432 = vpack.c.b16 %v417, %v416
    %v433 = vpack.c.b16 %v419, %v418
    %v434 = vpack.c.b16 %v421, %v420
    %v435 = vpack.c.b16 %v423, %v422
    %v436 = vpack.c.b16 %v425, %v424
    %v437 = vpack.c.b16 %v427, %v426
    %v438 = vpack.c.b16 %v429, %v428
    %v439 = vpack.c.b16 %v431, %v430
    %448 = vmatprep.subr.bf16.mxu0 0
    %449 = vmatpush1.bf16.msra.mxu0 %v432
    %450 = vmatprep.subr.bf16.mxu0 0
    %451 = vmatpush1.bf16.msra.mxu0 %v433
    %452 = vmatprep.subr.bf16.mxu0 0
    %453 = vmatpush1.bf16.msra.mxu0 %v434
    %454 = vmatprep.subr.bf16.mxu0 0
    %455 = vmatpush1.bf16.msra.mxu0 %v435
    %456 = vmatprep.subr.bf16.mxu0 0
    %457 = vmatpush1.bf16.msra.mxu0 %v436
    %458 = vmatprep.subr.bf16.mxu0 0
    %459 = vmatpush1.bf16.msra.mxu0 %v437
    %460 = vmatprep.subr.bf16.mxu0 0
    %461 = vmatpush1.bf16.msra.mxu0 %v438
    %462 = vmatprep.subr.bf16.mxu0 0
    %463 = vmatpush1.bf16.msra.mxu0 %v439
    %464 = vmatprep.subr.bf16.mxu0 0
    %465 = vmatpush1.bf16.msra.mxu0 0
    %466 = vmatprep.subr.bf16.mxu0 0
    %467 = vmatpush1.bf16.msra.mxu0 0
    %468 = vmatprep.subr.bf16.mxu0 0
    %469 = vmatpush1.bf16.msra.mxu0 0
    %470 = vmatprep.subr.bf16.mxu0 0
    %471 = vmatpush1.bf16.msra.mxu0 0
    %472 = vmatprep.subr.bf16.mxu0 0
    %473 = vmatpush1.bf16.msra.mxu0 0
    %474 = vmatprep.subr.bf16.mxu0 0
    %475 = vmatpush1.bf16.msra.mxu0 0
    %476 = vmatprep.subr.bf16.mxu0 0
    %477 = vmatpush1.bf16.msra.mxu0 0
    %478 = vmatprep.subr.bf16.mxu0 0
    %479 = vmatpush1.bf16.msra.mxu0 0
    %480 = vmatprep.mubr.bf16.mxu0 0
    %481 = vmatmul.mubr.bf16.gmra.mrb[0].mxu0 %v376
    %v482 = vpop.f32.mrb[0].mxu0
    %v483 = vadd.f32 %v399, %v482
    %v484 = vpop.f32.mrb[0].mxu0
    %v485 = vpop.f32.mrb[0].mxu0
    %v486 = vadd.f32 %v399, %v485
    %v487 = vpop.f32.mrb[0].mxu0
    %488 = vdwg.mxu0
    %489 = vadd.xlane.f32.xlu0 %v483
    %v490 = vpop.xlane.xlu0 %489
    %491 = vadd.xlane.f32.xlu0 %v486
    %v492 = vpop.xlane.xlu0 %491
    %v493 = vmul.f32 %v490, 0.020833334
    %v494 = vmul.f32 %v492, 0.020833334
    %v495 = vmul.f32 %v483, %v483
    %v496 = vmul.f32 %v486, %v486
    %497 = vadd.xlane.f32.xlu0 %v495
    %v498 = vpop.xlane.xlu0 %497
    %499 = vadd.xlane.f32.xlu0 %v496
    %v500 = vpop.xlane.xlu0 %499
    %v501 = vmul.f32 %v498, 0.020833334
    %v502 = vmul.f32 %v500, 0.020833334
    %v503 = vmul.f32 %v493, %v493
    %v504 = vmul.f32 %v494, %v494
    %v505 = vsub.f32 %v501, %v503
    %v506 = vsub.f32 %v502, %v504
    %v507 = vmax.f32 %v505, 0.0
    %v508 = vmax.f32 %v506, 0.0
    %v509 = vsub.f32 %v483, %v493
    %v510 = vsub.f32 %v486, %v494
    %v511 = vadd.f32 %v507, 1e-05
    %v512 = vadd.f32 %v508, 1e-05
    %v513 = vrsqrt.pop %v511
    %v514 = vrsqrt.pop %v512
    %v515 = vmul.f32 %v509, %v513
    %v516 = vmul.f32 %v510, %v514
    %v517 = vlaneseq
    %v518 = vshrl.u32 %v517, 7
    %v519 = vsub.s32 0, %v518
    %v520 = vrot.slane %v378, %v519
    %v521 = vmul.f32 %v515, %v520
    %v522 = vmul.f32 %v516, %v520
    %v523 = vlaneseq
    %v524 = vshrl.u32 %v523, 7
    %v525 = vsub.s32 0, %v524
    %v526 = vrot.slane %v379, %v525
    %v527 = vadd.f32 %v521, %v526
    %v528 = vadd.f32 %v522, %v526
    %vm529 = vcmp.ge.f32.partialorder %v527, 0.0
    %vm530 = vcmp.ge.f32.partialorder %v528, 0.0
    %v531 = vmul.f32 %v527, 0.01
    %v532 = vmul.f32 %v528, 0.01
    %v533 = vsel %vm529, %v527, %v531
    %v534 = vsel %vm530, %v528, %v532
    %v535 = vpack.c.bf16 %v534, %v533
    %v536 = vld [vmem:[#allocation17] sm:$0x1]
    %v537 = vld [vmem:[#allocation17 + $0x1] sm:$0x1]
    %v538 = vld [vmem:[#allocation17 + $0x2] sm:$0x1]
    %v539 = vld [vmem:[#allocation8] sm:$0xf]
    %v540 = vld [vmem:[#allocation8 + $0x4] sm:$0xf]
    %v541 = vld [vmem:[#allocation8 + $0x8] sm:$0xf]
    %v542 = vld [vmem:[#allocation8 + $0xc] sm:$0xf]
    %v543 = vld [vmem:[#allocation8 + $0x10] sm:$0xf]
    %v544 = vld [vmem:[#allocation8 + $0x14] sm:$0xf]
    %v545 = vld [vmem:[#allocation8 + $0x18] sm:$0xf]
    %v546 = vld [vmem:[#allocation8 + $0x1c] sm:$0xf]
    %v547 = vld [vmem:[#allocation8 + $0x20] sm:$0xf]
    %v548 = vld [vmem:[#allocation8 + $0x24] sm:$0xf]
    %v549 = vld [vmem:[#allocation8 + $0x28] sm:$0xf]
    %v550 = vld [vmem:[#allocation8 + $0x2c] sm:$0xf]
    %v551 = vld [vmem:[#allocation8 + $0x30] sm:$0xf]
    %v552 = vld [vmem:[#allocation8 + $0x34] sm:$0xf]
    %v553 = vld [vmem:[#allocation8 + $0x38] sm:$0xf]
    %v554 = vld [vmem:[#allocation8 + $0x3c] sm:$0xf]
    %v555 = vlaneseq
    %v556 = vshrl.u32 %v555, 7
    %v557 = vsub.s32 0, %v556
    %v558 = vrot.slane %v536, %v557
    %v575 = vunpack.c.l.b16 %v539
    %v576 = vunpack.c.l.b16 %v540
    %v577 = vunpack.c.l.b16 %v541
    %v578 = vunpack.c.l.b16 %v542
    %v579 = vunpack.c.l.b16 %v543
    %v580 = vunpack.c.l.b16 %v544
    %v581 = vunpack.c.l.b16 %v545
    %v582 = vunpack.c.l.b16 %v546
    %v583 = vunpack.c.l.b16 %v547
    %v584 = vunpack.c.l.b16 %v548
    %v585 = vunpack.c.l.b16 %v549
    %v586 = vunpack.c.l.b16 %v550
    %v587 = vunpack.c.l.b16 %v551
    %v588 = vunpack.c.l.b16 %v552
    %v589 = vunpack.c.l.b16 %v553
    %v590 = vunpack.c.l.b16 %v554
    %v591 = vpack.c.b16 %v576, %v575
    %v592 = vpack.c.b16 %v578, %v577
    %v593 = vpack.c.b16 %v580, %v579
    %v594 = vpack.c.b16 %v582, %v581
    %v595 = vpack.c.b16 %v584, %v583
    %v596 = vpack.c.b16 %v586, %v585
    %v597 = vpack.c.b16 %v588, %v587
    %v598 = vpack.c.b16 %v590, %v589
    %607 = vmatprep.subr.bf16.mxu0 0
    %608 = vmatpush1.bf16.msra.mxu0 %v591
    %609 = vmatprep.subr.bf16.mxu0 0
    %610 = vmatpush1.bf16.msra.mxu0 %v592
    %611 = vmatprep.subr.bf16.mxu0 0
    %612 = vmatpush1.bf16.msra.mxu0 %v593
    %613 = vmatprep.subr.bf16.mxu0 0
    %614 = vmatpush1.bf16.msra.mxu0 %v594
    %615 = vmatprep.subr.bf16.mxu0 0
    %616 = vmatpush1.bf16.msra.mxu0 %v595
    %617 = vmatprep.subr.bf16.mxu0 0
    %618 = vmatpush1.bf16.msra.mxu0 %v596
    %619 = vmatprep.subr.bf16.mxu0 0
    %620 = vmatpush1.bf16.msra.mxu0 %v597
    %621 = vmatprep.subr.bf16.mxu0 0
    %622 = vmatpush1.bf16.msra.mxu0 %v598
    %623 = vmatprep.subr.bf16.mxu0 0
    %624 = vmatpush1.bf16.msra.mxu0 0
    %625 = vmatprep.subr.bf16.mxu0 0
    %626 = vmatpush1.bf16.msra.mxu0 0
    %627 = vmatprep.subr.bf16.mxu0 0
    %628 = vmatpush1.bf16.msra.mxu0 0
    %629 = vmatprep.subr.bf16.mxu0 0
    %630 = vmatpush1.bf16.msra.mxu0 0
    %631 = vmatprep.subr.bf16.mxu0 0
    %632 = vmatpush1.bf16.msra.mxu0 0
    %633 = vmatprep.subr.bf16.mxu0 0
    %634 = vmatpush1.bf16.msra.mxu0 0
    %635 = vmatprep.subr.bf16.mxu0 0
    %636 = vmatpush1.bf16.msra.mxu0 0
    %637 = vmatprep.subr.bf16.mxu0 0
    %638 = vmatpush1.bf16.msra.mxu0 0
    %639 = vmatprep.mubr.bf16.mxu0 0
    %640 = vmatmul.mubr.bf16.gmra.mrb[0].mxu0 %v535
    %v641 = vpop.f32.mrb[0].mxu0
    %v642 = vadd.f32 %v558, %v641
    %v643 = vpop.f32.mrb[0].mxu0
    %v644 = vpop.f32.mrb[0].mxu0
    %v645 = vadd.f32 %v558, %v644
    %v646 = vpop.f32.mrb[0].mxu0
    %647 = vdwg.mxu0
    %648 = vadd.xlane.f32.xlu0 %v642
    %v649 = vpop.xlane.xlu0 %648
    %650 = vadd.xlane.f32.xlu0 %v645
    %v651 = vpop.xlane.xlu0 %650
    %v652 = vmul.f32 %v649, 0.041666668
    %v653 = vmul.f32 %v651, 0.041666668
    %v654 = vmul.f32 %v642, %v642
    %v655 = vmul.f32 %v645, %v645
    %656 = vadd.xlane.f32.xlu0 %v654
    %v657 = vpop.xlane.xlu0 %656
    %658 = vadd.xlane.f32.xlu0 %v655
    %v659 = vpop.xlane.xlu0 %658
    %v660 = vmul.f32 %v657, 0.041666668
    %v661 = vmul.f32 %v659, 0.041666668
    %v662 = vmul.f32 %v652, %v652
    %v663 = vmul.f32 %v653, %v653
    %v664 = vsub.f32 %v660, %v662
    %v665 = vsub.f32 %v661, %v663
    %v666 = vmax.f32 %v664, 0.0
    %v667 = vmax.f32 %v665, 0.0
    %v668 = vsub.f32 %v642, %v652
    %v669 = vsub.f32 %v645, %v653
    %v670 = vadd.f32 %v666, 1e-05
    %v671 = vadd.f32 %v667, 1e-05
    %v672 = vrsqrt.pop %v670
    %v673 = vrsqrt.pop %v671
    %v674 = vmul.f32 %v668, %v672
    %v675 = vmul.f32 %v669, %v673
    %v676 = vlaneseq
    %v677 = vshrl.u32 %v676, 7
    %v678 = vsub.s32 0, %v677
    %v679 = vrot.slane %v537, %v678
    %v680 = vmul.f32 %v674, %v679
    %v681 = vmul.f32 %v675, %v679
    %v682 = vlaneseq
    %v683 = vshrl.u32 %v682, 7
    %v684 = vsub.s32 0, %v683
    %v685 = vrot.slane %v538, %v684
    %v686 = vadd.f32 %v680, %v685
    %v687 = vadd.f32 %v681, %v685
    %vm688 = vcmp.ge.f32.partialorder %v686, 0.0
    %vm689 = vcmp.ge.f32.partialorder %v687, 0.0
    %v690 = vmul.f32 %v686, 0.01
    %v691 = vmul.f32 %v687, 0.01
    %v692 = vsel %vm688, %v686, %v690
    %v693 = vsel %vm689, %v687, %v691
    %v694 = vpack.c.bf16 %v693, %v692
    %v695 = vld [vmem:[#allocation19] sm:$0x1]
    %v696 = vld [vmem:[#allocation19 + $0x1] sm:$0x1]
    %v697 = vld [vmem:[#allocation19 + $0x2] sm:$0x1]
    %v698 = vld [vmem:[#allocation10] sm:$0xf]
    %v699 = vld [vmem:[#allocation10 + $0x4] sm:$0xf]
    %v700 = vld [vmem:[#allocation10 + $0x8] sm:$0xf]
    %v701 = vld [vmem:[#allocation10 + $0xc] sm:$0xf]
    %v702 = vld [vmem:[#allocation10 + $0x10] sm:$0xf]
    %v703 = vld [vmem:[#allocation10 + $0x14] sm:$0xf]
    %v704 = vld [vmem:[#allocation10 + $0x18] sm:$0xf]
    %v705 = vld [vmem:[#allocation10 + $0x1c] sm:$0xf]
    %v706 = vld [vmem:[#allocation10 + $0x20] sm:$0xf]
    %v707 = vld [vmem:[#allocation10 + $0x24] sm:$0xf]
    %v708 = vld [vmem:[#allocation10 + $0x28] sm:$0xf]
    %v709 = vld [vmem:[#allocation10 + $0x2c] sm:$0xf]
    %v710 = vld [vmem:[#allocation10 + $0x30] sm:$0xf]
    %v711 = vld [vmem:[#allocation10 + $0x34] sm:$0xf]
    %v712 = vld [vmem:[#allocation10 + $0x38] sm:$0xf]
    %v713 = vld [vmem:[#allocation10 + $0x3c] sm:$0xf]
    %v714 = vlaneseq
    %v715 = vshrl.u32 %v714, 7
    %v716 = vsub.s32 0, %v715
    %v717 = vrot.slane %v695, %v716
    %v734 = vunpack.c.l.b16 %v698
    %v735 = vunpack.c.l.b16 %v699
    %v736 = vunpack.c.l.b16 %v700
    %v737 = vunpack.c.l.b16 %v701
    %v738 = vunpack.c.l.b16 %v702
    %v739 = vunpack.c.l.b16 %v703
    %v740 = vunpack.c.l.b16 %v704
    %v741 = vunpack.c.l.b16 %v705
    %v742 = vunpack.c.l.b16 %v706
    %v743 = vunpack.c.l.b16 %v707
    %v744 = vunpack.c.l.b16 %v708
    %v745 = vunpack.c.l.b16 %v709
    %v746 = vunpack.c.l.b16 %v710
    %v747 = vunpack.c.l.b16 %v711
    %v748 = vunpack.c.l.b16 %v712
    %v749 = vunpack.c.l.b16 %v713
    %v750 = vpack.c.b16 %v735, %v734
    %v751 = vpack.c.b16 %v737, %v736
    %v752 = vpack.c.b16 %v739, %v738
    %v753 = vpack.c.b16 %v741, %v740
    %v754 = vpack.c.b16 %v743, %v742
    %v755 = vpack.c.b16 %v745, %v744
    %v756 = vpack.c.b16 %v747, %v746
    %v757 = vpack.c.b16 %v749, %v748
    %766 = vmatprep.subr.bf16.mxu0 0
    %767 = vmatpush1.bf16.msra.mxu0 %v750
    %768 = vmatprep.subr.bf16.mxu0 0
    %769 = vmatpush1.bf16.msra.mxu0 %v751
    %770 = vmatprep.subr.bf16.mxu0 0
    %771 = vmatpush1.bf16.msra.mxu0 %v752
    %772 = vmatprep.subr.bf16.mxu0 0
    %773 = vmatpush1.bf16.msra.mxu0 %v753
    %774 = vmatprep.subr.bf16.mxu0 0
    %775 = vmatpush1.bf16.msra.mxu0 %v754
    %776 = vmatprep.subr.bf16.mxu0 0
    %777 = vmatpush1.bf16.msra.mxu0 %v755
    %778 = vmatprep.subr.bf16.mxu0 0
    %779 = vmatpush1.bf16.msra.mxu0 %v756
    %780 = vmatprep.subr.bf16.mxu0 0
    %781 = vmatpush1.bf16.msra.mxu0 %v757
    %782 = vmatprep.subr.bf16.mxu0 0
    %783 = vmatpush1.bf16.msra.mxu0 0
    %784 = vmatprep.subr.bf16.mxu0 0
    %785 = vmatpush1.bf16.msra.mxu0 0
    %786 = vmatprep.subr.bf16.mxu0 0
    %787 = vmatpush1.bf16.msra.mxu0 0
    %788 = vmatprep.subr.bf16.mxu0 0
    %789 = vmatpush1.bf16.msra.mxu0 0
    %790 = vmatprep.subr.bf16.mxu0 0
    %791 = vmatpush1.bf16.msra.mxu0 0
    %792 = vmatprep.subr.bf16.mxu0 0
    %793 = vmatpush1.bf16.msra.mxu0 0
    %794 = vmatprep.subr.bf16.mxu0 0
    %795 = vmatpush1.bf16.msra.mxu0 0
    %796 = vmatprep.subr.bf16.mxu0 0
    %797 = vmatpush1.bf16.msra.mxu0 0
    %798 = vmatprep.mubr.bf16.mxu0 0
    %799 = vmatmul.mubr.bf16.gmra.mrb[0].mxu0 %v694
    %v800 = vpop.f32.mrb[0].mxu0
    %v801 = vadd.f32 %v717, %v800
    %v802 = vpop.f32.mrb[0].mxu0
    %v803 = vpop.f32.mrb[0].mxu0
    %v804 = vadd.f32 %v717, %v803
    %v805 = vpop.f32.mrb[0].mxu0
    %806 = vdwg.mxu0
    %807 = vadd.xlane.f32.xlu0 %v801
    %v808 = vpop.xlane.xlu0 %807
    %809 = vadd.xlane.f32.xlu0 %v804
    %v810 = vpop.xlane.xlu0 %809
    %v811 = vmul.f32 %v808, 0.020833334
    %v812 = vmul.f32 %v810, 0.020833334
    %v813 = vmul.f32 %v801, %v801
    %v814 = vmul.f32 %v804, %v804
    %815 = vadd.xlane.f32.xlu0 %v813
    %v816 = vpop.xlane.xlu0 %815
    %817 = vadd.xlane.f32.xlu0 %v814
    %v818 = vpop.xlane.xlu0 %817
    %v819 = vmul.f32 %v816, 0.020833334
    %v820 = vmul.f32 %v818, 0.020833334
    %v821 = vmul.f32 %v811, %v811
    %v822 = vmul.f32 %v812, %v812
    %v823 = vsub.f32 %v819, %v821
    %v824 = vsub.f32 %v820, %v822
    %v825 = vmax.f32 %v823, 0.0
    %v826 = vmax.f32 %v824, 0.0
    %v827 = vsub.f32 %v801, %v811
    %v828 = vsub.f32 %v804, %v812
    %v829 = vadd.f32 %v825, 1e-05
    %v830 = vadd.f32 %v826, 1e-05
    %v831 = vrsqrt.pop %v829
    %v832 = vrsqrt.pop %v830
    %v833 = vmul.f32 %v827, %v831
    %v834 = vmul.f32 %v828, %v832
    %v835 = vlaneseq
    %v836 = vshrl.u32 %v835, 7
    %v837 = vsub.s32 0, %v836
    %v838 = vrot.slane %v696, %v837
    %v839 = vmul.f32 %v833, %v838
    %v840 = vmul.f32 %v834, %v838
    %v841 = vlaneseq
    %v842 = vshrl.u32 %v841, 7
    %v843 = vsub.s32 0, %v842
    %v844 = vrot.slane %v697, %v843
    %v845 = vadd.f32 %v839, %v844
    %v846 = vadd.f32 %v840, %v844
    %vm847 = vcmp.ge.f32.partialorder %v845, 0.0
    %vm848 = vcmp.ge.f32.partialorder %v846, 0.0
    %v849 = vmul.f32 %v845, 0.01
    %v850 = vmul.f32 %v846, 0.01
    %v851 = vsel %vm847, %v845, %v849
    %v852 = vsel %vm848, %v846, %v850
    %v853 = vpack.c.bf16 %v852, %v851
    %v854 = vld [vmem:[#allocation20] sm:$0x1]
    %v855 = vld [vmem:[#allocation20 + $0x1] sm:$0x1]
    %v856 = vld [vmem:[#allocation20 + $0x2] sm:$0x1]
    %v857 = vld [vmem:[#allocation11] sm:$0xf]
    %v858 = vld [vmem:[#allocation11 + $0x4] sm:$0xf]
    %v859 = vld [vmem:[#allocation11 + $0x8] sm:$0xf]
    %v860 = vld [vmem:[#allocation11 + $0xc] sm:$0xf]
    %v861 = vld [vmem:[#allocation11 + $0x10] sm:$0xf]
    %v862 = vld [vmem:[#allocation11 + $0x14] sm:$0xf]
    %v863 = vld [vmem:[#allocation11 + $0x18] sm:$0xf]
    %v864 = vld [vmem:[#allocation11 + $0x1c] sm:$0xf]
    %v865 = vld [vmem:[#allocation11 + $0x20] sm:$0xf]
    %v866 = vld [vmem:[#allocation11 + $0x24] sm:$0xf]
    %v867 = vld [vmem:[#allocation11 + $0x28] sm:$0xf]
    %v868 = vld [vmem:[#allocation11 + $0x2c] sm:$0xf]
    %v869 = vld [vmem:[#allocation11 + $0x30] sm:$0xf]
    %v870 = vld [vmem:[#allocation11 + $0x34] sm:$0xf]
    %v871 = vld [vmem:[#allocation11 + $0x38] sm:$0xf]
    %v872 = vld [vmem:[#allocation11 + $0x3c] sm:$0xf]
    %v873 = vlaneseq
    %v874 = vshrl.u32 %v873, 7
    %v875 = vsub.s32 0, %v874
    %v876 = vrot.slane %v854, %v875
    %v893 = vunpack.c.l.b16 %v857
    %v894 = vunpack.c.l.b16 %v858
    %v895 = vunpack.c.l.b16 %v859
    %v896 = vunpack.c.l.b16 %v860
    %v897 = vunpack.c.l.b16 %v861
    %v898 = vunpack.c.l.b16 %v862
    %v899 = vunpack.c.l.b16 %v863
    %v900 = vunpack.c.l.b16 %v864
    %v901 = vunpack.c.l.b16 %v865
    %v902 = vunpack.c.l.b16 %v866
    %v903 = vunpack.c.l.b16 %v867
    %v904 = vunpack.c.l.b16 %v868
    %v905 = vunpack.c.l.b16 %v869
    %v906 = vunpack.c.l.b16 %v870
    %v907 = vunpack.c.l.b16 %v871
    %v908 = vunpack.c.l.b16 %v872
    %v909 = vpack.c.b16 %v894, %v893
    %v910 = vpack.c.b16 %v896, %v895
    %v911 = vpack.c.b16 %v898, %v897
    %v912 = vpack.c.b16 %v900, %v899
    %v913 = vpack.c.b16 %v902, %v901
    %v914 = vpack.c.b16 %v904, %v903
    %v915 = vpack.c.b16 %v906, %v905
    %v916 = vpack.c.b16 %v908, %v907
    %925 = vmatprep.subr.bf16.mxu0 0
    %926 = vmatpush1.bf16.msra.mxu0 %v909
    %927 = vmatprep.subr.bf16.mxu0 0
    %928 = vmatpush1.bf16.msra.mxu0 %v910
    %929 = vmatprep.subr.bf16.mxu0 0
    %930 = vmatpush1.bf16.msra.mxu0 %v911
    %931 = vmatprep.subr.bf16.mxu0 0
    %932 = vmatpush1.bf16.msra.mxu0 %v912
    %933 = vmatprep.subr.bf16.mxu0 0
    %934 = vmatpush1.bf16.msra.mxu0 %v913
    %935 = vmatprep.subr.bf16.mxu0 0
    %936 = vmatpush1.bf16.msra.mxu0 %v914
    %937 = vmatprep.subr.bf16.mxu0 0
    %938 = vmatpush1.bf16.msra.mxu0 %v915
    %939 = vmatprep.subr.bf16.mxu0 0
    %940 = vmatpush1.bf16.msra.mxu0 %v916
    %941 = vmatprep.subr.bf16.mxu0 0
    %942 = vmatpush1.bf16.msra.mxu0 0
    %943 = vmatprep.subr.bf16.mxu0 0
    %944 = vmatpush1.bf16.msra.mxu0 0
    %945 = vmatprep.subr.bf16.mxu0 0
    %946 = vmatpush1.bf16.msra.mxu0 0
    %947 = vmatprep.subr.bf16.mxu0 0
    %948 = vmatpush1.bf16.msra.mxu0 0
    %949 = vmatprep.subr.bf16.mxu0 0
    %950 = vmatpush1.bf16.msra.mxu0 0
    %951 = vmatprep.subr.bf16.mxu0 0
    %952 = vmatpush1.bf16.msra.mxu0 0
    %953 = vmatprep.subr.bf16.mxu0 0
    %954 = vmatpush1.bf16.msra.mxu0 0
    %955 = vmatprep.subr.bf16.mxu0 0
    %956 = vmatpush1.bf16.msra.mxu0 0
    %957 = vmatprep.mubr.bf16.mxu0 0
    %958 = vmatmul.mubr.bf16.gmra.mrb[0].mxu0 %v853
    %v959 = vpop.f32.mrb[0].mxu0
    %v960 = vadd.f32 %v876, %v959
    %v961 = vpop.f32.mrb[0].mxu0
    %v962 = vpop.f32.mrb[0].mxu0
    %v963 = vadd.f32 %v876, %v962
    %v964 = vpop.f32.mrb[0].mxu0
    %965 = vdwg.mxu0
    %966 = vadd.xlane.f32.xlu0 %v960
    %v967 = vpop.xlane.xlu0 %966
    %968 = vadd.xlane.f32.xlu0 %v963
    %v969 = vpop.xlane.xlu0 %968
    %v970 = vmul.f32 %v967, 0.013888889
    %v971 = vmul.f32 %v969, 0.013888889
    %v972 = vmul.f32 %v960, %v960
    %v973 = vmul.f32 %v963, %v963
    %974 = vadd.xlane.f32.xlu0 %v972
    %v975 = vpop.xlane.xlu0 %974
    %976 = vadd.xlane.f32.xlu0 %v973
    %v977 = vpop.xlane.xlu0 %976
    %v978 = vmul.f32 %v975, 0.013888889
    %v979 = vmul.f32 %v977, 0.013888889
    %v980 = vmul.f32 %v970, %v970
    %v981 = vmul.f32 %v971, %v971
    %v982 = vsub.f32 %v978, %v980
    %v983 = vsub.f32 %v979, %v981
    %v984 = vmax.f32 %v982, 0.0
    %v985 = vmax.f32 %v983, 0.0
    %v986 = vsub.f32 %v960, %v970
    %v987 = vsub.f32 %v963, %v971
    %v988 = vadd.f32 %v984, 1e-05
    %v989 = vadd.f32 %v985, 1e-05
    %v990 = vrsqrt.pop %v988
    %v991 = vrsqrt.pop %v989
    %v992 = vmul.f32 %v986, %v990
    %v993 = vmul.f32 %v987, %v991
    %v994 = vlaneseq
    %v995 = vshrl.u32 %v994, 7
    %v996 = vsub.s32 0, %v995
    %v997 = vrot.slane %v855, %v996
    %v998 = vmul.f32 %v992, %v997
    %v999 = vmul.f32 %v993, %v997
    %v1000 = vlaneseq
    %v1001 = vshrl.u32 %v1000, 7
    %v1002 = vsub.s32 0, %v1001
    %v1003 = vrot.slane %v856, %v1002
    %v1004 = vadd.f32 %v998, %v1003
    %v1005 = vadd.f32 %v999, %v1003
    %vm1006 = vcmp.ge.f32.partialorder %v1004, 0.0
    %vm1007 = vcmp.ge.f32.partialorder %v1005, 0.0
    %v1008 = vmul.f32 %v1004, 0.01
    %v1009 = vmul.f32 %v1005, 0.01
    %v1010 = vsel %vm1006, %v1004, %v1008
    %v1011 = vsel %vm1007, %v1005, %v1009
    %v1012 = vpack.c.bf16 %v1011, %v1010
    %v1013 = vld [vmem:[#allocation13] sm:$0xf]
    %v1014 = vld [vmem:[#allocation13 + $0x4] sm:$0xf]
    %v1015 = vld [vmem:[#allocation13 + $0x8] sm:$0xf]
    %v1016 = vld [vmem:[#allocation13 + $0xc] sm:$0xf]
    %v1017 = vld [vmem:[#allocation13 + $0x10] sm:$0xf]
    %v1018 = vld [vmem:[#allocation13 + $0x14] sm:$0xf]
    %v1019 = vld [vmem:[#allocation13 + $0x18] sm:$0xf]
    %v1020 = vld [vmem:[#allocation13 + $0x1c] sm:$0xf]
    %v1021 = vld [vmem:[#allocation13 + $0x20] sm:$0xf]
    %v1022 = vld [vmem:[#allocation13 + $0x24] sm:$0xf]
    %v1023 = vld [vmem:[#allocation13 + $0x28] sm:$0xf]
    %v1024 = vld [vmem:[#allocation13 + $0x2c] sm:$0xf]
    %v1025 = vld [vmem:[#allocation13 + $0x30] sm:$0xf]
    %v1026 = vld [vmem:[#allocation13 + $0x34] sm:$0xf]
    %v1027 = vld [vmem:[#allocation13 + $0x38] sm:$0xf]
    %v1028 = vld [vmem:[#allocation13 + $0x3c] sm:$0xf]
    %v1029 = vld [vmem:[#allocation22] sm:$0x1]
    %v1030 = vlaneseq
    %v1031 = vshrl.u32 %v1030, 7
    %v1032 = vsub.s32 0, %v1031
    %v1033 = vrot.slane %v1029, %v1032
    %v1050 = vunpack.c.l.b16 %v1013
    %v1051 = vunpack.c.l.b16 %v1014
    %v1052 = vunpack.c.l.b16 %v1015
    %v1053 = vunpack.c.l.b16 %v1016
    %v1054 = vunpack.c.l.b16 %v1017
    %v1055 = vunpack.c.l.b16 %v1018
    %v1056 = vunpack.c.l.b16 %v1019
    %v1057 = vunpack.c.l.b16 %v1020
    %v1058 = vunpack.c.l.b16 %v1021
    %v1059 = vunpack.c.l.b16 %v1022
    %v1060 = vunpack.c.l.b16 %v1023
    %v1061 = vunpack.c.l.b16 %v1024
    %v1062 = vunpack.c.l.b16 %v1025
    %v1063 = vunpack.c.l.b16 %v1026
    %v1064 = vunpack.c.l.b16 %v1027
    %v1065 = vunpack.c.l.b16 %v1028
    %v1066 = vpack.c.b16 %v1051, %v1050
    %v1067 = vpack.c.b16 %v1053, %v1052
    %v1068 = vpack.c.b16 %v1055, %v1054
    %v1069 = vpack.c.b16 %v1057, %v1056
    %v1070 = vpack.c.b16 %v1059, %v1058
    %v1071 = vpack.c.b16 %v1061, %v1060
    %v1072 = vpack.c.b16 %v1063, %v1062
    %v1073 = vpack.c.b16 %v1065, %v1064
    %1082 = vmatprep.subr.bf16.mxu0 0
    %1083 = vmatpush1.bf16.msra.mxu0 %v1066
    %1084 = vmatprep.subr.bf16.mxu0 0
    %1085 = vmatpush1.bf16.msra.mxu0 %v1067
    %1086 = vmatprep.subr.bf16.mxu0 0
    %1087 = vmatpush1.bf16.msra.mxu0 %v1068
    %1088 = vmatprep.subr.bf16.mxu0 0
    %1089 = vmatpush1.bf16.msra.mxu0 %v1069
    %1090 = vmatprep.subr.bf16.mxu0 0
    %1091 = vmatpush1.bf16.msra.mxu0 %v1070
    %1092 = vmatprep.subr.bf16.mxu0 0
    %1093 = vmatpush1.bf16.msra.mxu0 %v1071
    %1094 = vmatprep.subr.bf16.mxu0 0
    %1095 = vmatpush1.bf16.msra.mxu0 %v1072
    %1096 = vmatprep.subr.bf16.mxu0 0
    %1097 = vmatpush1.bf16.msra.mxu0 %v1073
    %1098 = vmatprep.subr.bf16.mxu0 0
    %1099 = vmatpush1.bf16.msra.mxu0 0
    %1100 = vmatprep.subr.bf16.mxu0 0
    %1101 = vmatpush1.bf16.msra.mxu0 0
    %1102 = vmatprep.subr.bf16.mxu0 0
    %1103 = vmatpush1.bf16.msra.mxu0 0
    %1104 = vmatprep.subr.bf16.mxu0 0
    %1105 = vmatpush1.bf16.msra.mxu0 0
    %1106 = vmatprep.subr.bf16.mxu0 0
    %1107 = vmatpush1.bf16.msra.mxu0 0
    %1108 = vmatprep.subr.bf16.mxu0 0
    %1109 = vmatpush1.bf16.msra.mxu0 0
    %1110 = vmatprep.subr.bf16.mxu0 0
    %1111 = vmatpush1.bf16.msra.mxu0 0
    %1112 = vmatprep.subr.bf16.mxu0 0
    %1113 = vmatpush1.bf16.msra.mxu0 0
    %1114 = vmatprep.mubr.bf16.mxu0 0
    %1115 = vmatmul.mubr.bf16.gmra.mrb[0].mxu0 %v1012
    %v1116 = vpop.f32.mrb[0].mxu0
    %v1117 = vadd.f32 %v1033, %v1116
    %v1118 = vpop.f32.mrb[0].mxu0
    %v1119 = vpop.f32.mrb[0].mxu0
    %v1120 = vadd.f32 %v1033, %v1119
    %v1121 = vpop.f32.mrb[0].mxu0
    %1122 = vdwg.mxu0
    %1123 = vst [vmem:[#allocation23] sm:$0xff] %v1117
    %1124 = vst [vmem:[#allocation23 + $0x8] sm:$0xff] %v1120
    // Predicated region
    $region106: #{_mlp_forward_impl.1} parent=1 // pred_check
      _
    $region107: #{_mlp_forward_impl.1} parent=1 // pred_check_branch
      %1126 = sbr.rel (0) target = $region109
    $region108: #{_mlp_forward_impl.1} parent=1 // pred_region
      %s1128 = ssub.s32 256, 256
      %1129 = vsyncadd [#allocation4], %s1128
      %s1130 = sshll.u32 [#allocation23], 4
      %s1131 = int_to_ptr.vmem [resolvable:$true] %s1130
      %1136 = dma.vmem_to_hbm [thread:$0]  %s1131, 256, %s13, [#allocation4], 128, 128, 8
    $region109: #{_mlp_forward_impl.1} parent=1 // pred_fallthru
      _
    // Predicated region
    $region110: #{_mlp_forward_impl.1} parent=1 // pred_check
      _
    $region111: #{_mlp_forward_impl.1} parent=1 // pred_check_branch
      %1138 = sbr.rel (0) target = $region113
    $region112: #{_mlp_forward_impl.1} parent=1 // pred_region
      %1139 = dma.done [#allocation4], 256
    $region113: #{_mlp_forward_impl.1} parent=1 // pred_fallthru
      _
    %1140 = vsyncpa [#allocation3], 1
    %1141 = vsyncpa [#allocation6], 1
    %1142 = vsyncpa [#allocation9], 1
    %1143 = vsyncpa [#allocation12], 1
    %1144 = vsyncpa [#allocation15], 1
    %1145 = vsyncpa [#allocation18], 1
    %1146 = vsyncpa [#allocation21], 1
    %1147 = vsyncpa [#allocation4], 1

</llo_original>
